<compile_context>
chip_gen: v6e
topology: v6e:2x2x1
jax: 0.10.0
libtpu: 0.0.40
codegen_flags: <defaults>
</compile_context>

<pallas_src>
import math
import inspect

import jax
import jax.numpy as jnp
from jax import lax
from jax.experimental import pallas as pl
from jax.experimental.pallas import tpu as pltpu

EPS = 1e-6
_INV_SQRT2 = 0.7071067811865476


def _layernorm(x, gamma, beta):
    # Matches the PyTorch module: mean over last dim, torch.std (unbiased, N-1),
    # gamma * (x - mean) / (std + eps) + beta   (eps added OUTSIDE the sqrt).
    d = x.shape[-1]
    mean = jnp.mean(x, axis=-1, keepdims=True)
    diff = x - mean
    var_unbiased = jnp.sum(diff * diff, axis=-1, keepdims=True) / (d - 1)
    std = jnp.sqrt(var_unbiased)
    inv = pl.reciprocal(std + EPS, approx=False)   # exact; approx=True -> EUP
    return gamma * (diff * inv) + beta


def _gelu_exact(x):
    # F.gelu default = exact erf formulation.
    return 0.5 * x * (1.0 + lax.erf(x * _INV_SQRT2))


# --------------- Kernel A: LN1 + fused QKV projection (head-major out) -------

def qkv_project_kernel(x_ref, g1_ref, b1_ref, wqkv_ref, q_ref, k_ref, v_ref):
    D = x_ref.shape[-1]
    H = q_ref.shape[1]
    hd = q_ref.shape[-1]

    xn = _layernorm(x_ref[0], g1_ref[...], b1_ref[...])            # (tq, D)
    # One lane-dense (tq, D) @ (D, 3D) matmul; Q block pre-scaled by 1/sqrt(hd).
    qkv = jnp.dot(xn, wqkv_ref[...], preferred_element_type=jnp.float32)
    for h in range(H):                                             # static unroll
        lo = h * hd
        q_ref[0, h] = qkv[:, lo:lo + hd]
        k_ref[0, h] = qkv[:, D + lo:D + lo + hd]
        v_ref[0, h] = qkv[:, 2 * D + lo:2 * D + lo + hd]


# -------- Kernel B: flash attention + W_o + residual + LN2 + FFN + residual --

def flash_ffn_kernel(x_ref, q_ref, k_ref, v_ref,
                     wo_ref, g2_ref, b2_ref, w1_ref, fb1_ref, w2_ref, fb2_ref,
                     o_ref,
                     m_scr, l_scr, acc_scr, merge_scr):
    ki = pl.program_id(2)
    num_kv = pl.num_programs(2)

    # ---- ki == 0: reset flash accumulator state for this (b, qi) tile ----
    @pl.when(ki == 0)
    def _():
        m_scr[...] = jnp.full(m_scr.shape, -jnp.inf, m_scr.dtype)
        l_scr[...] = jnp.zeros(l_scr.shape, l_scr.dtype)
        acc_scr[...] = jnp.zeros(acc_scr.shape, acc_scr.dtype)

    q = q_ref[0]                                  # (H, tq, hd), pre-scaled
    k = k_ref[0]                                  # (H, tk, hd)
    v = v_ref[0]                                  # (H, tk, hd)

    # Batched-over-heads scores; contraction over head_dim, lanes = tk.
    s = jnp.einsum('hqc,hkc->hqk', q, k,
                   preferred_element_type=jnp.float32)             # (H, tq, tk)

    m_prev = m_scr[...]
    m_new = jnp.maximum(m_prev, jnp.max(s, axis=-1, keepdims=True))
    alpha = jnp.exp(m_prev - m_new)
    p = jnp.exp(s - m_new)
    l_scr[...] = alpha * l_scr[...] + jnp.sum(p, axis=-1, keepdims=True)
    acc_scr[...] = alpha * acc_scr[...] + jnp.einsum(
        'hqk,hkc->hqc', p, v, preferred_element_type=jnp.float32)
    m_scr[...] = m_new

    # ---- last K/V tile: head merge, W_o, residual, LN2, FFN, residual ----
    @pl.when(ki == num_kv - 1)
    def _():
        H, tq, hd = acc_scr.shape
        inv_l = pl.reciprocal(l_scr[...], approx=False)
        attn = acc_scr[...] * inv_l                                # (H, tq, hd)
        # Head merge via static lane-slice stores (once per query tile).
        for h in range(H):
            merge_scr[:, h * hd:(h + 1) * hd] = attn[h]
        attn2d = merge_scr[...]                                    # (tq, D)

        attn_out = jnp.dot(attn2d, wo_ref[...],
                           preferred_element_type=jnp.float32)     # (tq, D)
        x1 = x_ref[0].astype(jnp.float32) + attn_out
        x2n = _layernorm(x1, g2_ref[...], b2_ref[...])
        h1 = jnp.dot(x2n, w1_ref[...],
                     preferred_element_type=jnp.float32) + fb1_ref[...]
        h1 = _gelu_exact(h1)
        ff = jnp.dot(h1, w2_ref[...],
                     preferred_element_type=jnp.float32) + fb2_ref[...]
        o_ref[0] = (x1 + ff).astype(o_ref.dtype)


# ------------------------------- wrapper --------------------------------------

def _weight_spec_kwargs(single_buffer):
    """Single-buffer constant-index weight blocks when the API supports it."""
    if not single_buffer:
        return {}
    try:
        if hasattr(pl, "Buffered") and \
                "pipeline_mode" in inspect.signature(pl.BlockSpec).parameters:
            return {"pipeline_mode": pl.Buffered(1)}
    except Exception:
        pass
    return {}


def _pick_tile(n, target=128):
    if n <= target:
        return n
    for t in range(target, 7, -1):
        if n % t == 0 and t % 8 == 0:
            return t
    return n


def transformer_encoder_layer(x, params, num_heads, *, tq=None, tk=None,
                              single_buffer_weights=True):
    B, N, D = x.shape
    assert D % num_heads == 0
    H = num_heads
    hd = D // H
    MLP = params["w1_t"].shape[1]

    tq = _pick_tile(N) if tq is None else tq
    tk = _pick_tile(N) if tk is None else tk
    assert N % tq == 0 and N % tk == 0, "sequence tiles must divide N"
    assert (tq % 8 == 0 or tq == N) and (tk % 8 == 0 or tk == N)

    f32 = jnp.float32
    scale = 1.0 / math.sqrt(hd)
    # Fused QKV weight, (D, 3D); 1/sqrt(hd) folded into the Q block (free, host-side).
    wqkv = jnp.concatenate(
        [params["wq_t"].astype(f32) * scale,
         params["wk_t"].astype(f32),
         params["wv_t"].astype(f32)], axis=1)

    wkw = _weight_spec_kwargs(single_buffer_weights)

    def const_spec_a(shape):
        nd = len(shape)
        return pl.BlockSpec(shape, lambda b, i, _nd=nd: (0,) * _nd, **wkw)

    def const_spec_b(shape):
        nd = len(shape)
        return pl.BlockSpec(shape, lambda b, qi, ki, _nd=nd: (0,) * _nd, **wkw)

    # ------------------ Kernel A: LN1 + QKV projection ------------------
    head_major = jax.ShapeDtypeStruct((B, H, N, hd), f32)
    bytes_w_a = (wqkv.size + 2 * D) * 4
    bytes_t_a = 4 * tq * D * 4            # x tile + q/k/v tiles
    vmem_a = int(min(127 << 20, 2 * bytes_w_a + 4 * bytes_t_a + (16 << 20)))

    q_hm, k_hm, v_hm = pl.pallas_call(
        qkv_project_kernel,
        out_shape=(head_major, head_major, head_major),
        grid_spec=pltpu.PrefetchScalarGridSpec(
            num_scalar_prefetch=0,
            grid=(B, N // tq),
            in_specs=[
                pl.BlockSpec((1, tq, D), lambda b, i: (b, i, 0)),
                const_spec_a((1, D)),
                const_spec_a((1, D)),
                const_spec_a((D, 3 * D)),
            ],
            out_specs=[
                pl.BlockSpec((1, H, tq, hd), lambda b, i: (b, 0, i, 0)),
                pl.BlockSpec((1, H, tq, hd), lambda b, i: (b, 0, i, 0)),
                pl.BlockSpec((1, H, tq, hd), lambda b, i: (b, 0, i, 0)),
            ],
        ),
        compiler_params=pltpu.CompilerParams(
            dimension_semantics=("parallel", "parallel"),
            vmem_limit_bytes=vmem_a),
    )(x, params["gamma1"], params["beta1"], wqkv)

    # --------------- Kernel B: flash attention + fused epilogue ---------------
    weights_b = [
        params["wo_t"], params["gamma2"], params["beta2"],
        params["w1_t"], params["b1"], params["w2_t"], params["b2"],
    ]
    bytes_w_b = sum(int(w.size) for w in weights_b) * 4
    bytes_t_b = (3 * tq * D + 2 * tk * D) * 4          # x, q, out + k, v tiles
    bytes_s_b = (2 * H * tq + H * tq * hd + tq * D) * 4
    vmem_b = int(min(127 << 20,
                     2 * bytes_w_b + 4 * bytes_t_b + 2 * bytes_s_b + (16 << 20)))

    out = pl.pallas_call(
        flash_ffn_kernel,
        out_shape=jax.ShapeDtypeStruct((B, N, D), x.dtype),
        grid_spec=pltpu.PrefetchScalarGridSpec(
            num_scalar_prefetch=0,
            grid=(B, N // tq, N // tk),
            in_specs=[
                pl.BlockSpec((1, tq, D), lambda b, qi, ki: (b, qi, 0)),      # x rows
                pl.BlockSpec((1, H, tq, hd), lambda b, qi, ki: (b, 0, qi, 0)),  # Q
                pl.BlockSpec((1, H, tk, hd), lambda b, qi, ki: (b, 0, ki, 0)),  # K
                pl.BlockSpec((1, H, tk, hd), lambda b, qi, ki: (b, 0, ki, 0)),  # V
                const_spec_b((D, D)),      # Wo
                const_spec_b((1, D)),      # gamma2
                const_spec_b((1, D)),      # beta2
                const_spec_b((D, MLP)),    # W1
                const_spec_b((1, MLP)),    # b1
                const_spec_b((MLP, D)),    # W2
                const_spec_b((1, D)),      # b2
            ],
            out_specs=pl.BlockSpec((1, tq, D), lambda b, qi, ki: (b, qi, 0)),
            scratch_shapes=[
                pltpu.VMEM((H, tq, 1), jnp.float32),    # running max
                pltpu.VMEM((H, tq, 1), jnp.float32),    # running sum
                pltpu.VMEM((H, tq, hd), jnp.float32),   # PV accumulator
                pltpu.VMEM((tq, D), jnp.float32),       # head-merge buffer
            ],
        ),
        compiler_params=pltpu.CompilerParams(
            dimension_semantics=("parallel", "parallel", "arbitrary"),
            vmem_limit_bytes=vmem_b),
    )(x, q_hm, k_hm, v_hm, *weights_b)

    return out


# ------------------------------ JAX reference ---------------------------------

def reference_jax(x, params, num_heads):
    def ln(y, g, b):
        d = y.shape[-1]
        mean = jnp.mean(y, axis=-1, keepdims=True)
        diff = y - mean
        std = jnp.sqrt(jnp.sum(diff * diff, axis=-1, keepdims=True) / (d - 1))
        return g * diff / (std + EPS) + b

    B, N, D = x.shape
    hd = D // num_heads
    xn = ln(x, params["gamma1"], params["beta1"])
    q = (xn @ params["wq_t"]).reshape(B, N, num_heads, hd).transpose(0, 2, 1, 3)
    k = (xn @ params["wk_t"]).reshape(B, N, num_heads, hd).transpose(0, 2, 1, 3)
    v = (xn @ params["wv_t"]).reshape(B, N, num_heads, hd).transpose(0, 2, 1, 3)
    s = jnp.einsum("bhnd,bhmd->bhnm", q, k) / (hd ** 0.5)
    p = jax.nn.softmax(s, axis=-1)
    o = jnp.einsum("bhnm,bhmd->bhnd", p, v).transpose(0, 2, 1, 3).reshape(B, N, D)
    x1 = x + o @ params["wo_t"]
    x2n = ln(x1, params["gamma2"], params["beta2"])
    h1 = jax.nn.gelu(x2n @ params["w1_t"] + params["b1"], approximate=False)
    return x1 + h1 @ params["w2_t"] + params["b2"]


if __name__ == "__main__":
    # Small shapes; N=16 with tq=tk=8 exercises the flash accumulator across
    # two K/V tiles, multiple query tiles, and the head-merge epilogue.
    B, N, D, H, MLP = 2, 16, 32, 4, 64
    key = jax.random.PRNGKey(0)
    ks = jax.random.split(key, 12)

    x = jax.random.normal(ks[0], (B, N, D), jnp.float32)
    # PyTorch Linear is y = x @ W.T + b; weights pre-transposed to (in, out).
    params = {
        "gamma1": 1.0 + 0.1 * jax.random.normal(ks[1], (1, D), jnp.float32),
        "beta1": 0.1 * jax.random.normal(ks[2], (1, D), jnp.float32),
        "wq_t": jax.random.normal(ks[3], (D, D), jnp.float32) * 0.05,
        "wk_t": jax.random.normal(ks[4], (D, D), jnp.float32) * 0.05,
        "wv_t": jax.random.normal(ks[5], (D, D), jnp.float32) * 0.05,
        "wo_t": jax.random.normal(ks[6], (D, D), jnp.float32) * 0.05,
        "gamma2": 1.0 + 0.1 * jax.random.normal(ks[7], (1, D), jnp.float32),
        "beta2": 0.1 * jax.random.normal(ks[8], (1, D), jnp.float32),
        "w1_t": jax.random.normal(ks[9], (D, MLP), jnp.float32) * 0.05,
        "b1": jax.random.normal(ks[10], (1, MLP), jnp.float32) * 0.02,
        "w2_t": jax.random.normal(ks[11], (MLP, D), jnp.float32) * 0.05,
        "b2": jnp.zeros((1, D), jnp.float32),
    }

    def run(single_buffer):
        out = transformer_encoder_layer(x, params, H, tq=8, tk=8,
                                        single_buffer_weights=single_buffer)
        return jax.block_until_ready(out)

    try:
        out = run(True)
    except Exception:
        # Older Pallas without BlockSpec(pipeline_mode=pl.Buffered(1)) support:
        # rebuild with default (double-buffered) weight specs.
        out = run(False)

    ref = reference_jax(x, params, H)
    assert out.shape == (B, N, D)
    assert jnp.allclose(out, ref, atol=1e-4, rtol=1e-4), "mismatch vs JAX reference"
    print("KERNEL_OK")
</pallas_src>

<mosaic_0001>
module attributes {stable_mosaic.version = 11 : i64} {
  func.func @qkv_project_kernel(%arg0: i32, %arg1: i32, %arg2: memref<1x8x32xf32, #tpu.memory_space<vmem>>, %arg3: memref<1x32xf32, #tpu.memory_space<vmem>>, %arg4: memref<1x32xf32, #tpu.memory_space<vmem>>, %arg5: memref<32x96xf32, #tpu.memory_space<vmem>>, %arg6: memref<1x4x8x8xf32, #tpu.memory_space<vmem>>, %arg7: memref<1x4x8x8xf32, #tpu.memory_space<vmem>>, %arg8: memref<1x4x8x8xf32, #tpu.memory_space<vmem>>) attributes {dimension_semantics = [#tpu.dimension_semantics<parallel>, #tpu.dimension_semantics<parallel>], iteration_bounds = array<i64: 2, 2>, scalar_prefetch = 0 : i64, scratch_operands = 0 : i64, tpu.core_type = #tpu.core_type<tc>, window_params = [{transform_indices = @transform_0, window_bounds = array<i64: 1, 8, 32>}, {pipeline_mode = #tpu.pipeline_mode<synchronous>, transform_indices = @transform_1, window_bounds = array<i64: 1, 32>}, {pipeline_mode = #tpu.pipeline_mode<synchronous>, transform_indices = @transform_2, window_bounds = array<i64: 1, 32>}, {pipeline_mode = #tpu.pipeline_mode<synchronous>, transform_indices = @transform_3, window_bounds = array<i64: 32, 96>}, {transform_indices = @transform_4, window_bounds = array<i64: 1, 4, 8, 8>}, {transform_indices = @transform_5, window_bounds = array<i64: 1, 4, 8, 8>}, {transform_indices = @transform_6, window_bounds = array<i64: 1, 4, 8, 8>}]} {
    %c0 = arith.constant 0 : index
    %c0_0 = arith.constant 0 : index
    %c0_1 = arith.constant 0 : index
    %0 = vector.load %arg2[%c0, %c0_0, %c0_1] : memref<1x8x32xf32, #tpu.memory_space<vmem>>, vector<1x8x32xf32>
    %1 = vector.shape_cast %0 : vector<1x8x32xf32> to vector<8x32xf32>
    %c0_2 = arith.constant 0 : index
    %c0_3 = arith.constant 0 : index
    %2 = vector.load %arg3[%c0_2, %c0_3] : memref<1x32xf32, #tpu.memory_space<vmem>>, vector<1x32xf32>
    %c0_4 = arith.constant 0 : index
    %c0_5 = arith.constant 0 : index
    %3 = vector.load %arg4[%c0_4, %c0_5] : memref<1x32xf32, #tpu.memory_space<vmem>>, vector<1x32xf32>
    %cst = arith.constant dense<0.000000e+00> : vector<8xf32>
    %4 = vector.multi_reduction <add>, %1, %cst [1] : vector<8x32xf32> to vector<8xf32>
    %5 = vector.shape_cast %4 : vector<8xf32> to vector<8x1xf32>
    %cst_6 = arith.constant 3.200000e+01 : f32
    %6 = vector.broadcast %cst_6 : f32 to vector<8x1xf32>
    %7 = arith.divf %5, %6 : vector<8x1xf32>
    %8 = vector.broadcast %7 : vector<8x1xf32> to vector<8x32xf32>
    %9 = arith.subf %1, %8 : vector<8x32xf32>
    %10 = arith.mulf %9, %9 : vector<8x32xf32>
    %cst_7 = arith.constant dense<0.000000e+00> : vector<8xf32>
    %11 = vector.multi_reduction <add>, %10, %cst_7 [1] : vector<8x32xf32> to vector<8xf32>
    %12 = vector.shape_cast %11 : vector<8xf32> to vector<8x1xf32>
    %cst_8 = arith.constant 3.100000e+01 : f32
    %13 = vector.broadcast %cst_8 : f32 to vector<8x1xf32>
    %14 = arith.divf %12, %13 : vector<8x1xf32>
    %15 = math.sqrt %14 : vector<8x1xf32>
    %cst_9 = arith.constant 9.99999997E-7 : f32
    %16 = vector.broadcast %cst_9 : f32 to vector<8x1xf32>
    %17 = arith.addf %15, %16 : vector<8x1xf32>
    %18 = tpu.reciprocal %17 : vector<8x1xf32> -> vector<8x1xf32>
    %19 = vector.broadcast %18 : vector<8x1xf32> to vector<8x32xf32>
    %20 = arith.mulf %9, %19 : vector<8x32xf32>
    %21 = vector.broadcast %2 : vector<1x32xf32> to vector<8x32xf32>
    %22 = arith.mulf %21, %20 : vector<8x32xf32>
    %23 = vector.broadcast %3 : vector<1x32xf32> to vector<8x32xf32>
    %24 = arith.addf %22, %23 : vector<8x32xf32>
    %c0_10 = arith.constant 0 : index
    %c0_11 = arith.constant 0 : index
    %25 = vector.load %arg5[%c0_10, %c0_11] : memref<32x96xf32, #tpu.memory_space<vmem>>, vector<32x96xf32>
    %cst_12 = arith.constant dense<0.000000e+00> : vector<8x96xf32>
    %26 = tpu.matmul %24, %25, %cst_12 {dimension_numbers = #tpu.dot_dimension_numbers<[1], [0], [0], [1], [0, 0, 1, 1], [], []>} : vector<8x32xf32>, vector<32x96xf32>, vector<8x96xf32> -> vector<8x96xf32>
    %27 = vector.extract_strided_slice %26 {offsets = [0, 0], sizes = [8, 8], strides = [1, 1]} : vector<8x96xf32> to vector<8x8xf32>
    %c0_13 = arith.constant 0 : index
    %c0_14 = arith.constant 0 : index
    %c0_15 = arith.constant 0 : index
    %c0_16 = arith.constant 0 : index
    %28 = vector.load %arg6[%c0_13, %c0_14, %c0_15, %c0_16] : memref<1x4x8x8xf32, #tpu.memory_space<vmem>>, vector<1x1x8x8xf32>
    %29 = vector.shape_cast %28 : vector<1x1x8x8xf32> to vector<8x8xf32>
    %30 = vector.shape_cast %27 : vector<8x8xf32> to vector<1x1x8x8xf32>
    tpu.vector_store %arg6[%c0_13, %c0_14, %c0_15, %c0_16], %30 {strides = array<i32>} : memref<1x4x8x8xf32, #tpu.memory_space<vmem>>, vector<1x1x8x8xf32>,
    %31 = vector.extract_strided_slice %26 {offsets = [0, 32], sizes = [8, 8], strides = [1, 1]} : vector<8x96xf32> to vector<8x8xf32>
    %c0_17 = arith.constant 0 : index
    %c0_18 = arith.constant 0 : index
    %c0_19 = arith.constant 0 : index
    %c0_20 = arith.constant 0 : index
    %32 = vector.load %arg7[%c0_17, %c0_18, %c0_19, %c0_20] : memref<1x4x8x8xf32, #tpu.memory_space<vmem>>, vector<1x1x8x8xf32>
    %33 = vector.shape_cast %32 : vector<1x1x8x8xf32> to vector<8x8xf32>
    %34 = vector.shape_cast %31 : vector<8x8xf32> to vector<1x1x8x8xf32>
    tpu.vector_store %arg7[%c0_17, %c0_18, %c0_19, %c0_20], %34 {strides = array<i32>} : memref<1x4x8x8xf32, #tpu.memory_space<vmem>>, vector<1x1x8x8xf32>,
    %35 = vector.extract_strided_slice %26 {offsets = [0, 64], sizes = [8, 8], strides = [1, 1]} : vector<8x96xf32> to vector<8x8xf32>
    %c0_21 = arith.constant 0 : index
    %c0_22 = arith.constant 0 : index
    %c0_23 = arith.constant 0 : index
    %c0_24 = arith.constant 0 : index
    %36 = vector.load %arg8[%c0_21, %c0_22, %c0_23, %c0_24] : memref<1x4x8x8xf32, #tpu.memory_space<vmem>>, vector<1x1x8x8xf32>
    %37 = vector.shape_cast %36 : vector<1x1x8x8xf32> to vector<8x8xf32>
    %38 = vector.shape_cast %35 : vector<8x8xf32> to vector<1x1x8x8xf32>
    tpu.vector_store %arg8[%c0_21, %c0_22, %c0_23, %c0_24], %38 {strides = array<i32>} : memref<1x4x8x8xf32, #tpu.memory_space<vmem>>, vector<1x1x8x8xf32>,
    %39 = vector.extract_strided_slice %26 {offsets = [0, 8], sizes = [8, 8], strides = [1, 1]} : vector<8x96xf32> to vector<8x8xf32>
    %c0_25 = arith.constant 0 : index
    %c1 = arith.constant 1 : index
    %c0_26 = arith.constant 0 : index
    %c0_27 = arith.constant 0 : index
    %40 = vector.load %arg6[%c0_25, %c1, %c0_26, %c0_27] : memref<1x4x8x8xf32, #tpu.memory_space<vmem>>, vector<1x1x8x8xf32>
    %41 = vector.shape_cast %40 : vector<1x1x8x8xf32> to vector<8x8xf32>
    %42 = vector.shape_cast %39 : vector<8x8xf32> to vector<1x1x8x8xf32>
    tpu.vector_store %arg6[%c0_25, %c1, %c0_26, %c0_27], %42 {strides = array<i32>} : memref<1x4x8x8xf32, #tpu.memory_space<vmem>>, vector<1x1x8x8xf32>,
    %43 = vector.extract_strided_slice %26 {offsets = [0, 40], sizes = [8, 8], strides = [1, 1]} : vector<8x96xf32> to vector<8x8xf32>
    %c0_28 = arith.constant 0 : index
    %c1_29 = arith.constant 1 : index
    %c0_30 = arith.constant 0 : index
    %c0_31 = arith.constant 0 : index
    %44 = vector.load %arg7[%c0_28, %c1_29, %c0_30, %c0_31] : memref<1x4x8x8xf32, #tpu.memory_space<vmem>>, vector<1x1x8x8xf32>
    %45 = vector.shape_cast %44 : vector<1x1x8x8xf32> to vector<8x8xf32>
    %46 = vector.shape_cast %43 : vector<8x8xf32> to vector<1x1x8x8xf32>
    tpu.vector_store %arg7[%c0_28, %c1_29, %c0_30, %c0_31], %46 {strides = array<i32>} : memref<1x4x8x8xf32, #tpu.memory_space<vmem>>, vector<1x1x8x8xf32>,
    %47 = vector.extract_strided_slice %26 {offsets = [0, 72], sizes = [8, 8], strides = [1, 1]} : vector<8x96xf32> to vector<8x8xf32>
    %c0_32 = arith.constant 0 : index
    %c1_33 = arith.constant 1 : index
    %c0_34 = arith.constant 0 : index
    %c0_35 = arith.constant 0 : index
    %48 = vector.load %arg8[%c0_32, %c1_33, %c0_34, %c0_35] : memref<1x4x8x8xf32, #tpu.memory_space<vmem>>, vector<1x1x8x8xf32>
    %49 = vector.shape_cast %48 : vector<1x1x8x8xf32> to vector<8x8xf32>
    %50 = vector.shape_cast %47 : vector<8x8xf32> to vector<1x1x8x8xf32>
    tpu.vector_store %arg8[%c0_32, %c1_33, %c0_34, %c0_35], %50 {strides = array<i32>} : memref<1x4x8x8xf32, #tpu.memory_space<vmem>>, vector<1x1x8x8xf32>,
    %51 = vector.extract_strided_slice %26 {offsets = [0, 16], sizes = [8, 8], strides = [1, 1]} : vector<8x96xf32> to vector<8x8xf32>
    %c0_36 = arith.constant 0 : index
    %c2 = arith.constant 2 : index
    %c0_37 = arith.constant 0 : index
    %c0_38 = arith.constant 0 : index
    %52 = vector.load %arg6[%c0_36, %c2, %c0_37, %c0_38] : memref<1x4x8x8xf32, #tpu.memory_space<vmem>>, vector<1x1x8x8xf32>
    %53 = vector.shape_cast %52 : vector<1x1x8x8xf32> to vector<8x8xf32>
    %54 = vector.shape_cast %51 : vector<8x8xf32> to vector<1x1x8x8xf32>
    tpu.vector_store %arg6[%c0_36, %c2, %c0_37, %c0_38], %54 {strides = array<i32>} : memref<1x4x8x8xf32, #tpu.memory_space<vmem>>, vector<1x1x8x8xf32>,
    %55 = vector.extract_strided_slice %26 {offsets = [0, 48], sizes = [8, 8], strides = [1, 1]} : vector<8x96xf32> to vector<8x8xf32>
    %c0_39 = arith.constant 0 : index
    %c2_40 = arith.constant 2 : index
    %c0_41 = arith.constant 0 : index
    %c0_42 = arith.constant 0 : index
    %56 = vector.load %arg7[%c0_39, %c2_40, %c0_41, %c0_42] : memref<1x4x8x8xf32, #tpu.memory_space<vmem>>, vector<1x1x8x8xf32>
    %57 = vector.shape_cast %56 : vector<1x1x8x8xf32> to vector<8x8xf32>
    %58 = vector.shape_cast %55 : vector<8x8xf32> to vector<1x1x8x8xf32>
    tpu.vector_store %arg7[%c0_39, %c2_40, %c0_41, %c0_42], %58 {strides = array<i32>} : memref<1x4x8x8xf32, #tpu.memory_space<vmem>>, vector<1x1x8x8xf32>,
    %59 = vector.extract_strided_slice %26 {offsets = [0, 80], sizes = [8, 8], strides = [1, 1]} : vector<8x96xf32> to vector<8x8xf32>
    %c0_43 = arith.constant 0 : index
    %c2_44 = arith.constant 2 : index
    %c0_45 = arith.constant 0 : index
    %c0_46 = arith.constant 0 : index
    %60 = vector.load %arg8[%c0_43, %c2_44, %c0_45, %c0_46] : memref<1x4x8x8xf32, #tpu.memory_space<vmem>>, vector<1x1x8x8xf32>
    %61 = vector.shape_cast %60 : vector<1x1x8x8xf32> to vector<8x8xf32>
    %62 = vector.shape_cast %59 : vector<8x8xf32> to vector<1x1x8x8xf32>
    tpu.vector_store %arg8[%c0_43, %c2_44, %c0_45, %c0_46], %62 {strides = array<i32>} : memref<1x4x8x8xf32, #tpu.memory_space<vmem>>, vector<1x1x8x8xf32>,
    %63 = vector.extract_strided_slice %26 {offsets = [0, 24], sizes = [8, 8], strides = [1, 1]} : vector<8x96xf32> to vector<8x8xf32>
    %c0_47 = arith.constant 0 : index
    %c3 = arith.constant 3 : index
    %c0_48 = arith.constant 0 : index
    %c0_49 = arith.constant 0 : index
    %64 = vector.load %arg6[%c0_47, %c3, %c0_48, %c0_49] : memref<1x4x8x8xf32, #tpu.memory_space<vmem>>, vector<1x1x8x8xf32>
    %65 = vector.shape_cast %64 : vector<1x1x8x8xf32> to vector<8x8xf32>
    %66 = vector.shape_cast %63 : vector<8x8xf32> to vector<1x1x8x8xf32>
    tpu.vector_store %arg6[%c0_47, %c3, %c0_48, %c0_49], %66 {strides = array<i32>} : memref<1x4x8x8xf32, #tpu.memory_space<vmem>>, vector<1x1x8x8xf32>,
    %67 = vector.extract_strided_slice %26 {offsets = [0, 56], sizes = [8, 8], strides = [1, 1]} : vector<8x96xf32> to vector<8x8xf32>
    %c0_50 = arith.constant 0 : index
    %c3_51 = arith.constant 3 : index
    %c0_52 = arith.constant 0 : index
    %c0_53 = arith.constant 0 : index
    %68 = vector.load %arg7[%c0_50, %c3_51, %c0_52, %c0_53] : memref<1x4x8x8xf32, #tpu.memory_space<vmem>>, vector<1x1x8x8xf32>
    %69 = vector.shape_cast %68 : vector<1x1x8x8xf32> to vector<8x8xf32>
    %70 = vector.shape_cast %67 : vector<8x8xf32> to vector<1x1x8x8xf32>
    tpu.vector_store %arg7[%c0_50, %c3_51, %c0_52, %c0_53], %70 {strides = array<i32>} : memref<1x4x8x8xf32, #tpu.memory_space<vmem>>, vector<1x1x8x8xf32>,
    %71 = vector.extract_strided_slice %26 {offsets = [0, 88], sizes = [8, 8], strides = [1, 1]} : vector<8x96xf32> to vector<8x8xf32>
    %c0_54 = arith.constant 0 : index
    %c3_55 = arith.constant 3 : index
    %c0_56 = arith.constant 0 : index
    %c0_57 = arith.constant 0 : index
    %72 = vector.load %arg8[%c0_54, %c3_55, %c0_56, %c0_57] : memref<1x4x8x8xf32, #tpu.memory_space<vmem>>, vector<1x1x8x8xf32>
    %73 = vector.shape_cast %72 : vector<1x1x8x8xf32> to vector<8x8xf32>
    %74 = vector.shape_cast %71 : vector<8x8xf32> to vector<1x1x8x8xf32>
    tpu.vector_store %arg8[%c0_54, %c3_55, %c0_56, %c0_57], %74 {strides = array<i32>} : memref<1x4x8x8xf32, #tpu.memory_space<vmem>>, vector<1x1x8x8xf32>,
    return
  }
  func.func @transform_0(%arg0: i32, %arg1: i32) -> (i32, i32, i32) {
    %c0_i32 = arith.constant 0 : i32
    %c0_i32_0 = arith.constant 0 : i32
    return %arg0, %arg1, %c0_i32 : i32, i32, i32
  }
  func.func @transform_1(%arg0: i32, %arg1: i32) -> (i32, i32) {
    %c0_i32 = arith.constant 0 : i32
    %c0_i32_0 = arith.constant 0 : i32
    %c0_i32_1 = arith.constant 0 : i32
    return %c0_i32, %c0_i32_0 : i32, i32
  }
  func.func @transform_2(%arg0: i32, %arg1: i32) -> (i32, i32) {
    %c0_i32 = arith.constant 0 : i32
    %c0_i32_0 = arith.constant 0 : i32
    %c0_i32_1 = arith.constant 0 : i32
    return %c0_i32, %c0_i32_0 : i32, i32
  }
  func.func @transform_3(%arg0: i32, %arg1: i32) -> (i32, i32) {
    %c0_i32 = arith.constant 0 : i32
    %c0_i32_0 = arith.constant 0 : i32
    %c0_i32_1 = arith.constant 0 : i32
    return %c0_i32, %c0_i32_0 : i32, i32
  }
  func.func @transform_4(%arg0: i32, %arg1: i32) -> (i32, i32, i32, i32) {
    %c0_i32 = arith.constant 0 : i32
    %c0_i32_0 = arith.constant 0 : i32
    %c0_i32_1 = arith.constant 0 : i32
    return %arg0, %c0_i32, %arg1, %c0_i32_0 : i32, i32, i32, i32
  }
  func.func @transform_5(%arg0: i32, %arg1: i32) -> (i32, i32, i32, i32) {
    %c0_i32 = arith.constant 0 : i32
    %c0_i32_0 = arith.constant 0 : i32
    %c0_i32_1 = arith.constant 0 : i32
    return %arg0, %c0_i32, %arg1, %c0_i32_0 : i32, i32, i32, i32
  }
  func.func @transform_6(%arg0: i32, %arg1: i32) -> (i32, i32, i32, i32) {
    %c0_i32 = arith.constant 0 : i32
    %c0_i32_0 = arith.constant 0 : i32
    %c0_i32_1 = arith.constant 0 : i32
    return %arg0, %c0_i32, %arg1, %c0_i32_0 : i32, i32, i32, i32
  }
}

module attributes {stable_mosaic.version = 11 : i64} {
  func.func @qkv_project_kernel(%arg0: i32, %arg1: i32, %arg2: memref<1x8x32xf32, #tpu.memory_space<vmem>>, %arg3: memref<1x32xf32, #tpu.memory_space<vmem>>, %arg4: memref<1x32xf32, #tpu.memory_space<vmem>>, %arg5: memref<32x96xf32, #tpu.memory_space<vmem>>, %arg6: memref<1x4x8x8xf32, #tpu.memory_space<vmem>>, %arg7: memref<1x4x8x8xf32, #tpu.memory_space<vmem>>, %arg8: memref<1x4x8x8xf32, #tpu.memory_space<vmem>>) attributes {dimension_semantics = [#tpu.dimension_semantics<parallel>, #tpu.dimension_semantics<parallel>], iteration_bounds = array<i64: 2, 2>, scalar_prefetch = 0 : i64, scratch_operands = 0 : i64, tpu.core_type = #tpu.core_type<tc>, window_params = [{transform_indices = @transform_0, window_bounds = array<i64: 1, 8, 32>}, {pipeline_mode = #tpu.pipeline_mode<synchronous>, transform_indices = @transform_1, window_bounds = array<i64: 1, 32>}, {pipeline_mode = #tpu.pipeline_mode<synchronous>, transform_indices = @transform_2, window_bounds = array<i64: 1, 32>}, {pipeline_mode = #tpu.pipeline_mode<synchronous>, transform_indices = @transform_3, window_bounds = array<i64: 32, 96>}, {transform_indices = @transform_4, window_bounds = array<i64: 1, 4, 8, 8>}, {transform_indices = @transform_5, window_bounds = array<i64: 1, 4, 8, 8>}, {transform_indices = @transform_6, window_bounds = array<i64: 1, 4, 8, 8>}]} {
    %c0 = arith.constant 0 : index
    %c0_0 = arith.constant 0 : index
    %c0_1 = arith.constant 0 : index
    %0 = vector.load %arg2[%c0, %c0_0, %c0_1] : memref<1x8x32xf32, #tpu.memory_space<vmem>>, vector<1x8x32xf32>
    %1 = vector.shape_cast %0 : vector<1x8x32xf32> to vector<8x32xf32>
    %c0_2 = arith.constant 0 : index
    %c0_3 = arith.constant 0 : index
    %2 = vector.load %arg3[%c0_2, %c0_3] : memref<1x32xf32, #tpu.memory_space<vmem>>, vector<1x32xf32>
    %c0_4 = arith.constant 0 : index
    %c0_5 = arith.constant 0 : index
    %3 = vector.load %arg4[%c0_4, %c0_5] : memref<1x32xf32, #tpu.memory_space<vmem>>, vector<1x32xf32>
    %cst = arith.constant dense<0.000000e+00> : vector<8xf32>
    %4 = vector.multi_reduction <add>, %1, %cst [1] : vector<8x32xf32> to vector<8xf32>
    %5 = vector.shape_cast %4 : vector<8xf32> to vector<8x1xf32>
    %cst_6 = arith.constant 3.200000e+01 : f32
    %6 = vector.broadcast %cst_6 : f32 to vector<8x1xf32>
    %7 = arith.divf %5, %6 : vector<8x1xf32>
    %8 = vector.broadcast %7 : vector<8x1xf32> to vector<8x32xf32>
    %9 = arith.subf %1, %8 : vector<8x32xf32>
    %10 = arith.mulf %9, %9 : vector<8x32xf32>
    %cst_7 = arith.constant dense<0.000000e+00> : vector<8xf32>
    %11 = vector.multi_reduction <add>, %10, %cst_7 [1] : vector<8x32xf32> to vector<8xf32>
    %12 = vector.shape_cast %11 : vector<8xf32> to vector<8x1xf32>
    %cst_8 = arith.constant 3.100000e+01 : f32
    %13 = vector.broadcast %cst_8 : f32 to vector<8x1xf32>
    %14 = arith.divf %12, %13 : vector<8x1xf32>
    %15 = math.sqrt %14 : vector<8x1xf32>
    %cst_9 = arith.constant 9.99999997E-7 : f32
    %16 = vector.broadcast %cst_9 : f32 to vector<8x1xf32>
    %17 = arith.addf %15, %16 : vector<8x1xf32>
    %18 = tpu.reciprocal %17 : vector<8x1xf32> -> vector<8x1xf32>
    %19 = vector.broadcast %18 : vector<8x1xf32> to vector<8x32xf32>
    %20 = arith.mulf %9, %19 : vector<8x32xf32>
    %21 = vector.broadcast %2 : vector<1x32xf32> to vector<8x32xf32>
    %22 = arith.mulf %21, %20 : vector<8x32xf32>
    %23 = vector.broadcast %3 : vector<1x32xf32> to vector<8x32xf32>
    %24 = arith.addf %22, %23 : vector<8x32xf32>
    %c0_10 = arith.constant 0 : index
    %c0_11 = arith.constant 0 : index
    %25 = vector.load %arg5[%c0_10, %c0_11] : memref<32x96xf32, #tpu.memory_space<vmem>>, vector<32x96xf32>
    %cst_12 = arith.constant dense<0.000000e+00> : vector<8x96xf32>
    %26 = tpu.matmul %24, %25, %cst_12 {dimension_numbers = #tpu.dot_dimension_numbers<[1], [0], [0], [1], [0, 0, 1, 1], [], []>} : vector<8x32xf32>, vector<32x96xf32>, vector<8x96xf32> -> vector<8x96xf32>
    %27 = vector.extract_strided_slice %26 {offsets = [0, 0], sizes = [8, 8], strides = [1, 1]} : vector<8x96xf32> to vector<8x8xf32>
    %c0_13 = arith.constant 0 : index
    %c0_14 = arith.constant 0 : index
    %c0_15 = arith.constant 0 : index
    %c0_16 = arith.constant 0 : index
    %28 = vector.load %arg6[%c0_13, %c0_14, %c0_15, %c0_16] : memref<1x4x8x8xf32, #tpu.memory_space<vmem>>, vector<1x1x8x8xf32>
    %29 = vector.shape_cast %28 : vector<1x1x8x8xf32> to vector<8x8xf32>
    %30 = vector.shape_cast %27 : vector<8x8xf32> to vector<1x1x8x8xf32>
    tpu.vector_store %arg6[%c0_13, %c0_14, %c0_15, %c0_16], %30 {strides = array<i32>} : memref<1x4x8x8xf32, #tpu.memory_space<vmem>>, vector<1x1x8x8xf32>,
    %31 = vector.extract_strided_slice %26 {offsets = [0, 32], sizes = [8, 8], strides = [1, 1]} : vector<8x96xf32> to vector<8x8xf32>
    %c0_17 = arith.constant 0 : index
    %c0_18 = arith.constant 0 : index
    %c0_19 = arith.constant 0 : index
    %c0_20 = arith.constant 0 : index
    %32 = vector.load %arg7[%c0_17, %c0_18, %c0_19, %c0_20] : memref<1x4x8x8xf32, #tpu.memory_space<vmem>>, vector<1x1x8x8xf32>
    %33 = vector.shape_cast %32 : vector<1x1x8x8xf32> to vector<8x8xf32>
    %34 = vector.shape_cast %31 : vector<8x8xf32> to vector<1x1x8x8xf32>
    tpu.vector_store %arg7[%c0_17, %c0_18, %c0_19, %c0_20], %34 {strides = array<i32>} : memref<1x4x8x8xf32, #tpu.memory_space<vmem>>, vector<1x1x8x8xf32>,
    %35 = vector.extract_strided_slice %26 {offsets = [0, 64], sizes = [8, 8], strides = [1, 1]} : vector<8x96xf32> to vector<8x8xf32>
    %c0_21 = arith.constant 0 : index
    %c0_22 = arith.constant 0 : index
    %c0_23 = arith.constant 0 : index
    %c0_24 = arith.constant 0 : index
    %36 = vector.load %arg8[%c0_21, %c0_22, %c0_23, %c0_24] : memref<1x4x8x8xf32, #tpu.memory_space<vmem>>, vector<1x1x8x8xf32>
    %37 = vector.shape_cast %36 : vector<1x1x8x8xf32> to vector<8x8xf32>
    %38 = vector.shape_cast %35 : vector<8x8xf32> to vector<1x1x8x8xf32>
    tpu.vector_store %arg8[%c0_21, %c0_22, %c0_23, %c0_24], %38 {strides = array<i32>} : memref<1x4x8x8xf32, #tpu.memory_space<vmem>>, vector<1x1x8x8xf32>,
    %39 = vector.extract_strided_slice %26 {offsets = [0, 8], sizes = [8, 8], strides = [1, 1]} : vector<8x96xf32> to vector<8x8xf32>
    %c0_25 = arith.constant 0 : index
    %c1 = arith.constant 1 : index
    %c0_26 = arith.constant 0 : index
    %c0_27 = arith.constant 0 : index
    %40 = vector.load %arg6[%c0_25, %c1, %c0_26, %c0_27] : memref<1x4x8x8xf32, #tpu.memory_space<vmem>>, vector<1x1x8x8xf32>
    %41 = vector.shape_cast %40 : vector<1x1x8x8xf32> to vector<8x8xf32>
    %42 = vector.shape_cast %39 : vector<8x8xf32> to vector<1x1x8x8xf32>
    tpu.vector_store %arg6[%c0_25, %c1, %c0_26, %c0_27], %42 {strides = array<i32>} : memref<1x4x8x8xf32, #tpu.memory_space<vmem>>, vector<1x1x8x8xf32>,
    %43 = vector.extract_strided_slice %26 {offsets = [0, 40], sizes = [8, 8], strides = [1, 1]} : vector<8x96xf32> to vector<8x8xf32>
    %c0_28 = arith.constant 0 : index
    %c1_29 = arith.constant 1 : index
    %c0_30 = arith.constant 0 : index
    %c0_31 = arith.constant 0 : index
    %44 = vector.load %arg7[%c0_28, %c1_29, %c0_30, %c0_31] : memref<1x4x8x8xf32, #tpu.memory_space<vmem>>, vector<1x1x8x8xf32>
    %45 = vector.shape_cast %44 : vector<1x1x8x8xf32> to vector<8x8xf32>
    %46 = vector.shape_cast %43 : vector<8x8xf32> to vector<1x1x8x8xf32>
    tpu.vector_store %arg7[%c0_28, %c1_29, %c0_30, %c0_31], %46 {strides = array<i32>} : memref<1x4x8x8xf32, #tpu.memory_space<vmem>>, vector<1x1x8x8xf32>,
    %47 = vector.extract_strided_slice %26 {offsets = [0, 72], sizes = [8, 8], strides = [1, 1]} : vector<8x96xf32> to vector<8x8xf32>
    %c0_32 = arith.constant 0 : index
    %c1_33 = arith.constant 1 : index
    %c0_34 = arith.constant 0 : index
    %c0_35 = arith.constant 0 : index
    %48 = vector.load %arg8[%c0_32, %c1_33, %c0_34, %c0_35] : memref<1x4x8x8xf32, #tpu.memory_space<vmem>>, vector<1x1x8x8xf32>
    %49 = vector.shape_cast %48 : vector<1x1x8x8xf32> to vector<8x8xf32>
    %50 = vector.shape_cast %47 : vector<8x8xf32> to vector<1x1x8x8xf32>
    tpu.vector_store %arg8[%c0_32, %c1_33, %c0_34, %c0_35], %50 {strides = array<i32>} : memref<1x4x8x8xf32, #tpu.memory_space<vmem>>, vector<1x1x8x8xf32>,
    %51 = vector.extract_strided_slice %26 {offsets = [0, 16], sizes = [8, 8], strides = [1, 1]} : vector<8x96xf32> to vector<8x8xf32>
    %c0_36 = arith.constant 0 : index
    %c2 = arith.constant 2 : index
    %c0_37 = arith.constant 0 : index
    %c0_38 = arith.constant 0 : index
    %52 = vector.load %arg6[%c0_36, %c2, %c0_37, %c0_38] : memref<1x4x8x8xf32, #tpu.memory_space<vmem>>, vector<1x1x8x8xf32>
    %53 = vector.shape_cast %52 : vector<1x1x8x8xf32> to vector<8x8xf32>
    %54 = vector.shape_cast %51 : vector<8x8xf32> to vector<1x1x8x8xf32>
    tpu.vector_store %arg6[%c0_36, %c2, %c0_37, %c0_38], %54 {strides = array<i32>} : memref<1x4x8x8xf32, #tpu.memory_space<vmem>>, vector<1x1x8x8xf32>,
    %55 = vector.extract_strided_slice %26 {offsets = [0, 48], sizes = [8, 8], strides = [1, 1]} : vector<8x96xf32> to vector<8x8xf32>
    %c0_39 = arith.constant 0 : index
    %c2_40 = arith.constant 2 : index
    %c0_41 = arith.constant 0 : index
    %c0_42 = arith.constant 0 : index
    %56 = vector.load %arg7[%c0_39, %c2_40, %c0_41, %c0_42] : memref<1x4x8x8xf32, #tpu.memory_space<vmem>>, vector<1x1x8x8xf32>
    %57 = vector.shape_cast %56 : vector<1x1x8x8xf32> to vector<8x8xf32>
    %58 = vector.shape_cast %55 : vector<8x8xf32> to vector<1x1x8x8xf32>
    tpu.vector_store %arg7[%c0_39, %c2_40, %c0_41, %c0_42], %58 {strides = array<i32>} : memref<1x4x8x8xf32, #tpu.memory_space<vmem>>, vector<1x1x8x8xf32>,
    %59 = vector.extract_strided_slice %26 {offsets = [0, 80], sizes = [8, 8], strides = [1, 1]} : vector<8x96xf32> to vector<8x8xf32>
    %c0_43 = arith.constant 0 : index
    %c2_44 = arith.constant 2 : index
    %c0_45 = arith.constant 0 : index
    %c0_46 = arith.constant 0 : index
    %60 = vector.load %arg8[%c0_43, %c2_44, %c0_45, %c0_46] : memref<1x4x8x8xf32, #tpu.memory_space<vmem>>, vector<1x1x8x8xf32>
    %61 = vector.shape_cast %60 : vector<1x1x8x8xf32> to vector<8x8xf32>
    %62 = vector.shape_cast %59 : vector<8x8xf32> to vector<1x1x8x8xf32>
    tpu.vector_store %arg8[%c0_43, %c2_44, %c0_45, %c0_46], %62 {strides = array<i32>} : memref<1x4x8x8xf32, #tpu.memory_space<vmem>>, vector<1x1x8x8xf32>,
    %63 = vector.extract_strided_slice %26 {offsets = [0, 24], sizes = [8, 8], strides = [1, 1]} : vector<8x96xf32> to vector<8x8xf32>
    %c0_47 = arith.constant 0 : index
    %c3 = arith.constant 3 : index
    %c0_48 = arith.constant 0 : index
    %c0_49 = arith.constant 0 : index
    %64 = vector.load %arg6[%c0_47, %c3, %c0_48, %c0_49] : memref<1x4x8x8xf32, #tpu.memory_space<vmem>>, vector<1x1x8x8xf32>
    %65 = vector.shape_cast %64 : vector<1x1x8x8xf32> to vector<8x8xf32>
    %66 = vector.shape_cast %63 : vector<8x8xf32> to vector<1x1x8x8xf32>
    tpu.vector_store %arg6[%c0_47, %c3, %c0_48, %c0_49], %66 {strides = array<i32>} : memref<1x4x8x8xf32, #tpu.memory_space<vmem>>, vector<1x1x8x8xf32>,
    %67 = vector.extract_strided_slice %26 {offsets = [0, 56], sizes = [8, 8], strides = [1, 1]} : vector<8x96xf32> to vector<8x8xf32>
    %c0_50 = arith.constant 0 : index
    %c3_51 = arith.constant 3 : index
    %c0_52 = arith.constant 0 : index
    %c0_53 = arith.constant 0 : index
    %68 = vector.load %arg7[%c0_50, %c3_51, %c0_52, %c0_53] : memref<1x4x8x8xf32, #tpu.memory_space<vmem>>, vector<1x1x8x8xf32>
    %69 = vector.shape_cast %68 : vector<1x1x8x8xf32> to vector<8x8xf32>
    %70 = vector.shape_cast %67 : vector<8x8xf32> to vector<1x1x8x8xf32>
    tpu.vector_store %arg7[%c0_50, %c3_51, %c0_52, %c0_53], %70 {strides = array<i32>} : memref<1x4x8x8xf32, #tpu.memory_space<vmem>>, vector<1x1x8x8xf32>,
    %71 = vector.extract_strided_slice %26 {offsets = [0, 88], sizes = [8, 8], strides = [1, 1]} : vector<8x96xf32> to vector<8x8xf32>
    %c0_54 = arith.constant 0 : index
    %c3_55 = arith.constant 3 : index
    %c0_56 = arith.constant 0 : index
    %c0_57 = arith.constant 0 : index
    %72 = vector.load %arg8[%c0_54, %c3_55, %c0_56, %c0_57] : memref<1x4x8x8xf32, #tpu.memory_space<vmem>>, vector<1x1x8x8xf32>
    %73 = vector.shape_cast %72 : vector<1x1x8x8xf32> to vector<8x8xf32>
    %74 = vector.shape_cast %71 : vector<8x8xf32> to vector<1x1x8x8xf32>
    tpu.vector_store %arg8[%c0_54, %c3_55, %c0_56, %c0_57], %74 {strides = array<i32>} : memref<1x4x8x8xf32, #tpu.memory_space<vmem>>, vector<1x1x8x8xf32>,
    return
  }
  func.func @transform_0(%arg0: i32, %arg1: i32) -> (i32, i32, i32) {
    %c0_i32 = arith.constant 0 : i32
    %c0_i32_0 = arith.constant 0 : i32
    return %arg0, %arg1, %c0_i32 : i32, i32, i32
  }
  func.func @transform_1(%arg0: i32, %arg1: i32) -> (i32, i32) {
    %c0_i32 = arith.constant 0 : i32
    %c0_i32_0 = arith.constant 0 : i32
    %c0_i32_1 = arith.constant 0 : i32
    return %c0_i32, %c0_i32_0 : i32, i32
  }
  func.func @transform_2(%arg0: i32, %arg1: i32) -> (i32, i32) {
    %c0_i32 = arith.constant 0 : i32
    %c0_i32_0 = arith.constant 0 : i32
    %c0_i32_1 = arith.constant 0 : i32
    return %c0_i32, %c0_i32_0 : i32, i32
  }
  func.func @transform_3(%arg0: i32, %arg1: i32) -> (i32, i32) {
    %c0_i32 = arith.constant 0 : i32
    %c0_i32_0 = arith.constant 0 : i32
    %c0_i32_1 = arith.constant 0 : i32
    return %c0_i32, %c0_i32_0 : i32, i32
  }
  func.func @transform_4(%arg0: i32, %arg1: i32) -> (i32, i32, i32, i32) {
    %c0_i32 = arith.constant 0 : i32
    %c0_i32_0 = arith.constant 0 : i32
    %c0_i32_1 = arith.constant 0 : i32
    return %arg0, %c0_i32, %arg1, %c0_i32_0 : i32, i32, i32, i32
  }
  func.func @transform_5(%arg0: i32, %arg1: i32) -> (i32, i32, i32, i32) {
    %c0_i32 = arith.constant 0 : i32
    %c0_i32_0 = arith.constant 0 : i32
    %c0_i32_1 = arith.constant 0 : i32
    return %arg0, %c0_i32, %arg1, %c0_i32_0 : i32, i32, i32, i32
  }
  func.func @transform_6(%arg0: i32, %arg1: i32) -> (i32, i32, i32, i32) {
    %c0_i32 = arith.constant 0 : i32
    %c0_i32_0 = arith.constant 0 : i32
    %c0_i32_1 = arith.constant 0 : i32
    return %arg0, %c0_i32, %arg1, %c0_i32_0 : i32, i32, i32, i32
  }
}

</mosaic_0001>

<llo_original>
// kernel: tpu_custom_call.1
$region0: #{tpu_custom_call.1}
  #allocation0 [shape = 'u32[]', space=smem, size = 0x4, offset = 0x4, fixed_abs, tag = 'smem constant byte address 0x4 - core index']
  #allocation1 [shape = 'u32[144,128]{1,0:T(1,128)}', space=vmem, size = 0x12000, scoped, tag = 'internal scratch']
  %s0 = inlined_call_operand.hbm [shape: f32[2,16,32], index: 0, kind: input, shape index: {}]
  %s1 = inlined_call_operand.vmem [shape: f32[1,32], index: 1, kind: input, shape index: {}]
  %s2 = inlined_call_operand.vmem [shape: f32[1,32], index: 2, kind: input, shape index: {}]
  %s3 = inlined_call_operand.hbm [shape: f32[32,96], index: 3, kind: input, shape index: {}]
  %s4 = inlined_call_operand.vmem [shape: f32[2,4,16,8], index: 4, kind: output, shape index: {0}]
  %s5 = inlined_call_operand.vmem [shape: f32[2,4,16,8], index: 5, kind: output, shape index: {1}]
  %s6 = inlined_call_operand.vmem [shape: f32[2,4,16,8], index: 6, kind: output, shape index: {2}]
  %7 = xla_tuple %s4, %s5, %s6
  %s8 = sld [smem:[#allocation0]]
  $region175: #{tpu_custom_call.1} parent=0
    _
  %s10 = ssub.s32 1, %s8
  %s11 = scalar_select 0, %s10, %s8
  $region1: #{tpu_custom_call.1} parent=0
    #allocation2 [shape = 'u8[8192]{0}', space=vmem, size = 0x2000, scoped, tag = 'input window, operand 0']
    #allocation3 [shape = 's32[2]{0}', space=sflag, size = 0x8, scoped, tag = 'scoped memory for tpu_custom_call.1']
    #allocation4 [shape = 'u8[16384]{0}', space=vmem, size = 0x4000, scoped, tag = 'input window, operand 3, single buffered']
    #allocation5 [shape = 's32[1]{0}', space=sflag, size = 0x4, scoped, tag = 'scoped memory for tpu_custom_call.1']
    #allocation6 [shape = 'u8[32768]{0}', space=vmem, size = 0x8000, scoped, tag = 'output window, operand 0']
    #allocation7 [shape = 'u8[32768]{0}', space=vmem, size = 0x8000, scoped, tag = 'output window, operand 1']
    #allocation8 [shape = 'u8[32768]{0}', space=vmem, size = 0x8000, scoped, tag = 'output window, operand 2']
    %12 = vsyncpa [#allocation3], 0
    %s13 = scalar_lea.sflag [#allocation3], 1
    %14 = vsyncpa %s13, 0
    %15 = vsyncpa [#allocation5], 0
    loop: start=0, step=1, limit=6
    $region2: #{tpu_custom_call.1} parent=1 // loop_pre_header
      _
    $region3: #{tpu_custom_call.1} parent=1 // loop_header
      %s17 = sphi 0, %s21
      %p18 = scmp.ge.s32.totalorder %s17, 6
      %s24 = sphi 0, %s36
      %s25 = sphi 0, %s32
      %s26 = sphi 0, %s24
      %s27 = sphi 0, %s25
      %s28 = sphi 0, %s26
      %s29 = sphi 0, %s27
      %s41 = sphi 0, %s43
      %s44 = sphi 0, %s41
      %s45 = sphi 0, %s44
      %s61 = sphi 0, %s45
      %s65 = sphi 0, %s65
      %s67 = sphi 0, %s65
      %s68 = sphi 0, %s67
      %s82 = sphi 0, %s68
      %s86 = sphi 0, %s86
      %s88 = sphi 0, %s86
      %s89 = sphi 0, %s88
      %s103 = sphi 0, %s89
      %s107 = sphi 0, %s107
      %s109 = sphi 0, %s107
      %s110 = sphi 0, %s109
      %s124 = sphi 0, %s110
      %s132 = sphi 0, %s134
      %s135 = sphi 0, %s132
      %s136 = sphi 0, %s135
      %s152 = sphi 0, %s136
      %s160 = sphi 0, %s162
      %s163 = sphi 0, %s160
      %s164 = sphi 0, %s163
      %s180 = sphi 0, %s164
      %s188 = sphi 0, %s190
      %s191 = sphi 0, %s188
      %s192 = sphi 0, %s191
      %s208 = sphi 0, %s192
    $region4: #{tpu_custom_call.1} parent=1 // loop_header_branch
      %20 = sbr.rel (%p18) target = $region8
    $region5: #{tpu_custom_call.1} parent=1 // loop_body
      %s22 = ssub.s32 %s17, 1
      %s23 = ssub.s32 %s17, 2
      %s30 = sadd.s32 1, %s25
      %p31 = scmp.ge.s32.totalorder %s30, 2
      %s32 = scalar_select %p31, 0, %s30
      %s33 = sadd.s32 1, %s24
      %s34 = scalar_select %p31, %s33, %s24
      %p35 = scmp.ge.s32.totalorder %s34, 2
      %s36 = scalar_select %p35, 0, %s34
      %s37 = ssub.s32 %s24, %s36
      %s38 = ssub.s32 %s25, %s32
      %s39 = sor.u32 %s37, %s38
      %p40 = scmp.eq.s32.totalorder %s39, 0
      %s42 = sadd.s32 %s41, 1
      %s43 = scalar_select %p40, %s41, %s42
      %p46 = pneg %p40
      %p47 = scmp.eq.s32.totalorder %s17, 3
      %p48 = por %p46, %p47
      %p49 = scmp.ne.s32.totalorder %s41, %s44
      %p50 = scmp.eq.s32.totalorder %s17, 0
      %p51 = por %p49, %p50
      %p52 = scmp.ne.s32.totalorder %s41, %s44
      %p53 = scmp.eq.s32.totalorder %s22, 3
      %p54 = por %p52, %p53
      %p55 = scmp.ne.s32.totalorder %s44, %s45
      %p56 = scmp.eq.s32.totalorder %s22, 0
      %p57 = por %p55, %p56
      %p58 = scmp.ne.s32.totalorder %s44, %s45
      %p59 = scmp.eq.s32.totalorder %s23, 3
      %p60 = por %p58, %p59
      %p62 = scmp.ne.s32.totalorder %s45, %s61
      %p63 = scmp.eq.s32.totalorder %s23, 0
      %p64 = por %p62, %p63
      %s66 = sadd.s32 %s65, 1
      %p69 = scmp.eq.s32.totalorder %s17, 3
      %p70 = scmp.ne.s32.totalorder %s65, %s67
      %p71 = scmp.eq.s32.totalorder %s17, 0
      %p72 = por %p70, %p71
      %p73 = scmp.ne.s32.totalorder %s65, %s67
      %p74 = scmp.eq.s32.totalorder %s22, 3
      %p75 = por %p73, %p74
      %p76 = scmp.ne.s32.totalorder %s67, %s68
      %p77 = scmp.eq.s32.totalorder %s22, 0
      %p78 = por %p76, %p77
      %p79 = scmp.ne.s32.totalorder %s67, %s68
      %p80 = scmp.eq.s32.totalorder %s23, 3
      %p81 = por %p79, %p80
      %p83 = scmp.ne.s32.totalorder %s68, %s82
      %p84 = scmp.eq.s32.totalorder %s23, 0
      %p85 = por %p83, %p84
      %s87 = sadd.s32 %s86, 1
      %p90 = scmp.eq.s32.totalorder %s17, 3
      %p91 = scmp.ne.s32.totalorder %s86, %s88
      %p92 = scmp.eq.s32.totalorder %s17, 0
      %p93 = por %p91, %p92
      %p94 = scmp.ne.s32.totalorder %s86, %s88
      %p95 = scmp.eq.s32.totalorder %s22, 3
      %p96 = por %p94, %p95
      %p97 = scmp.ne.s32.totalorder %s88, %s89
      %p98 = scmp.eq.s32.totalorder %s22, 0
      %p99 = por %p97, %p98
      %p100 = scmp.ne.s32.totalorder %s88, %s89
      %p101 = scmp.eq.s32.totalorder %s23, 3
      %p102 = por %p100, %p101
      %p104 = scmp.ne.s32.totalorder %s89, %s103
      %p105 = scmp.eq.s32.totalorder %s23, 0
      %p106 = por %p104, %p105
      %s108 = sadd.s32 %s107, 1
      %p111 = scmp.eq.s32.totalorder %s17, 3
      %p112 = scmp.ne.s32.totalorder %s107, %s109
      %p113 = scmp.eq.s32.totalorder %s17, 0
      %p114 = por %p112, %p113
      %p115 = scmp.ne.s32.totalorder %s107, %s109
      %p116 = scmp.eq.s32.totalorder %s22, 3
      %p117 = por %p115, %p116
      %p118 = scmp.ne.s32.totalorder %s109, %s110
      %p119 = scmp.eq.s32.totalorder %s22, 0
      %p120 = por %p118, %p119
      %p121 = scmp.ne.s32.totalorder %s109, %s110
      %p122 = scmp.eq.s32.totalorder %s23, 3
      %p123 = por %p121, %p122
      %p125 = scmp.ne.s32.totalorder %s110, %s124
      %p126 = scmp.eq.s32.totalorder %s23, 0
      %p127 = por %p125, %p126
      %s128 = ssub.s32 %s24, %s36
      %s129 = ssub.s32 %s25, %s32
      %s130 = sor.u32 %s128, %s129
      %p131 = scmp.eq.s32.totalorder %s130, 0
      %s133 = sadd.s32 %s132, 1
      %s134 = scalar_select %p131, %s132, %s133
      %p137 = pneg %p131
      %p138 = scmp.eq.s32.totalorder %s17, 3
      %p139 = por %p137, %p138
      %p140 = scmp.ne.s32.totalorder %s132, %s135
      %p141 = scmp.eq.s32.totalorder %s17, 0
      %p142 = por %p140, %p141
      %p143 = scmp.ne.s32.totalorder %s132, %s135
      %p144 = scmp.eq.s32.totalorder %s22, 3
      %p145 = por %p143, %p144
      %p146 = scmp.ne.s32.totalorder %s135, %s136
      %p147 = scmp.eq.s32.totalorder %s22, 0
      %p148 = por %p146, %p147
      %p149 = scmp.ne.s32.totalorder %s135, %s136
      %p150 = scmp.eq.s32.totalorder %s23, 3
      %p151 = por %p149, %p150
      %p153 = scmp.ne.s32.totalorder %s136, %s152
      %p154 = scmp.eq.s32.totalorder %s23, 0
      %p155 = por %p153, %p154
      %s156 = ssub.s32 %s24, %s36
      %s157 = ssub.s32 %s25, %s32
      %s158 = sor.u32 %s156, %s157
      %p159 = scmp.eq.s32.totalorder %s158, 0
      %s161 = sadd.s32 %s160, 1
      %s162 = scalar_select %p159, %s160, %s161
      %p165 = pneg %p159
      %p166 = scmp.eq.s32.totalorder %s17, 3
      %p167 = por %p165, %p166
      %p168 = scmp.ne.s32.totalorder %s160, %s163
      %p169 = scmp.eq.s32.totalorder %s17, 0
      %p170 = por %p168, %p169
      %p171 = scmp.ne.s32.totalorder %s160, %s163
      %p172 = scmp.eq.s32.totalorder %s22, 3
      %p173 = por %p171, %p172
      %p174 = scmp.ne.s32.totalorder %s163, %s164
      %p175 = scmp.eq.s32.totalorder %s22, 0
      %p176 = por %p174, %p175
      %p177 = scmp.ne.s32.totalorder %s163, %s164
      %p178 = scmp.eq.s32.totalorder %s23, 3
      %p179 = por %p177, %p178
      %p181 = scmp.ne.s32.totalorder %s164, %s180
      %p182 = scmp.eq.s32.totalorder %s23, 0
      %p183 = por %p181, %p182
      %s184 = ssub.s32 %s24, %s36
      %s185 = ssub.s32 %s25, %s32
      %s186 = sor.u32 %s184, %s185
      %p187 = scmp.eq.s32.totalorder %s186, 0
      %s189 = sadd.s32 %s188, 1
      %s190 = scalar_select %p187, %s188, %s189
      %p193 = pneg %p187
      %p194 = scmp.eq.s32.totalorder %s17, 3
      %p195 = por %p193, %p194
      %p196 = scmp.ne.s32.totalorder %s188, %s191
      %p197 = scmp.eq.s32.totalorder %s17, 0
      %p198 = por %p196, %p197
      %p199 = scmp.ne.s32.totalorder %s188, %s191
      %p200 = scmp.eq.s32.totalorder %s22, 3
      %p201 = por %p199, %p200
      %p202 = scmp.ne.s32.totalorder %s191, %s192
      %p203 = scmp.eq.s32.totalorder %s22, 0
      %p204 = por %p202, %p203
      %p205 = scmp.ne.s32.totalorder %s191, %s192
      %p206 = scmp.eq.s32.totalorder %s23, 3
      %p207 = por %p205, %p206
      %p209 = scmp.ne.s32.totalorder %s192, %s208
      %p210 = scmp.eq.s32.totalorder %s23, 0
      %p211 = por %p209, %p210
      %p212 = scmp.le.s32.totalorder 1, %s17
      %p213 = scmp.lt.s32.totalorder %s17, 5
      %p214 = pnand %p212, %p213
      %p215 = pneg %p214
      // Predicated region
      $region9: #{tpu_custom_call.1} parent=5 // pred_check
        _
      $region10: #{tpu_custom_call.1} parent=5 // pred_check_branch
        %217 = sbr.rel (%p214) target = $region12
      $region11: #{tpu_custom_call.1} parent=5 // pred_region
        %s218 = ssub.s32 %s17, 1
        // Predicated region
        $region13: #{tpu_custom_call.1} parent=11 // pred_check
          %p219 = pneg %p78
        $region14: #{tpu_custom_call.1} parent=11 // pred_check_branch
          %221 = sbr.rel (%p219) target = $region16
        $region15: #{tpu_custom_call.1} parent=11 // pred_region
          _
        $region16: #{tpu_custom_call.1} parent=11 // pred_fallthru
          _
        // Predicated region
        $region17: #{tpu_custom_call.1} parent=11 // pred_check
          %p222 = pneg %p99
        $region18: #{tpu_custom_call.1} parent=11 // pred_check_branch
          %224 = sbr.rel (%p222) target = $region20
        $region19: #{tpu_custom_call.1} parent=11 // pred_region
          _
        $region20: #{tpu_custom_call.1} parent=11 // pred_fallthru
          _
        // Predicated region
        $region21: #{tpu_custom_call.1} parent=11 // pred_check
          %p225 = pneg %p120
        $region22: #{tpu_custom_call.1} parent=11 // pred_check_branch
          %227 = sbr.rel (%p225) target = $region24
        $region23: #{tpu_custom_call.1} parent=11 // pred_region
          %s229 = ssub.s32 512, 512
          %230 = vsyncadd [#allocation5], %s229
          %s231 = sshll.u32 [#allocation4], 4
          %s232 = int_to_ptr.vmem [resolvable:$true] %s231
          %237 = dma.hbm_to_vmem [thread:$0]  %s3, 512, %s232, [#allocation5], 128, 128, 8
        $region24: #{tpu_custom_call.1} parent=11 // pred_fallthru
          _
      $region12: #{tpu_custom_call.1} parent=5 // pred_fallthru
        _
      %p238 = scmp.lt.s32.totalorder %s17, 4
      // Predicated region
      $region25: #{tpu_custom_call.1} parent=5 // pred_check
        %p239 = pneg %p238
      $region26: #{tpu_custom_call.1} parent=5 // pred_check_branch
        %241 = sbr.rel (%p239) target = $region28
      $region27: #{tpu_custom_call.1} parent=5 // pred_region
        // Predicated region
        $region29: #{tpu_custom_call.1} parent=27 // pred_check
          %p242 = pneg %p51
        $region30: #{tpu_custom_call.1} parent=27 // pred_check_branch
          %244 = sbr.rel (%p242) target = $region32
        $region31: #{tpu_custom_call.1} parent=27 // pred_region
          %s245 = sand.u32 %s41, 1
          %s246 = scalar_lea.sflag [#allocation3], %s245
          %s247 = sand.u32 %s41, 1
          %s248 = smul.addr %s247, 8
          %s249 = scalar_lea.vmem [#allocation2], %s248
          %s251 = ssub.s32 128, 128
          %252 = vsyncadd %s246, %s251
          %s253 = smul.addr %s24, 2
          %s254 = sadd.s32 %s25, %s253
          %s255 = smul.addr %s254, 128
          %s256 = scalar_lea.hbm %s0, %s255
          %s258 = sshll.u32 %s249, 4
          %s259 = int_to_ptr.vmem [resolvable:$true] %s258
          %261 = dma.hbm_to_vmem [thread:$0]  %s256, 128, %s259, %s246
        $region32: #{tpu_custom_call.1} parent=27 // pred_fallthru
          _
      $region28: #{tpu_custom_call.1} parent=5 // pred_fallthru
        _
      %p262 = scmp.le.s32.totalorder 1, %s17
      %p263 = scmp.lt.s32.totalorder %s17, 5
      %p264 = pnand %p262, %p263
      %p265 = pneg %p264
      // Predicated region
      $region33: #{tpu_custom_call.1} parent=5 // pred_check
        _
      $region34: #{tpu_custom_call.1} parent=5 // pred_check_branch
        %267 = sbr.rel (%p264) target = $region36
      $region35: #{tpu_custom_call.1} parent=5 // pred_region
        %s268 = ssub.s32 %s17, 1
        %s269 = sand.u32 %s44, 1
        %s270 = scalar_lea.sflag [#allocation3], %s269
        %s271 = sand.u32 %s44, 1
        %s272 = smul.addr %s271, 8
        %s273 = scalar_lea.vmem [#allocation2], %s272
        // Predicated region
        $region37: #{tpu_custom_call.1} parent=35 // pred_check
          %p274 = pneg %p57
        $region38: #{tpu_custom_call.1} parent=35 // pred_check_branch
          %276 = sbr.rel (%p274) target = $region40
        $region39: #{tpu_custom_call.1} parent=35 // pred_region
          %277 = dma.done %s270, 128
        $region40: #{tpu_custom_call.1} parent=35 // pred_fallthru
          _
        // Predicated region
        $region41: #{tpu_custom_call.1} parent=35 // pred_check
          %p278 = pneg %p120
        $region42: #{tpu_custom_call.1} parent=35 // pred_check_branch
          %280 = sbr.rel (%p278) target = $region44
        $region43: #{tpu_custom_call.1} parent=35 // pred_region
          %281 = dma.done [#allocation5], 512
        $region44: #{tpu_custom_call.1} parent=35 // pred_fallthru
          _
        %s282 = sand.u32 %s44, 1
        %s283 = scalar_lea.sflag [#allocation3], %s282
        %s284 = sand.u32 %s44, 1
        %s285 = smul.addr %s284, 8
        %s286 = scalar_lea.vmem [#allocation2], %s285
        %p287 = pneg %p57
        %p288 = pneg %p54
        %p289 = pneg %p78
        %p290 = pneg %p75
        %p291 = pneg %p99
        %p292 = pneg %p96
        %p293 = pneg %p120
        %p294 = pneg %p117
        %p295 = pneg %p148
        %p296 = pneg %p145
        %s297 = sand.u32 %s135, 1
        %s298 = sand.u32 %s135, 1
        %s299 = smul.addr %s298, 32
        %s300 = scalar_lea.vmem [#allocation6], %s299
        %p301 = pneg %p176
        %p302 = pneg %p173
        %s303 = sand.u32 %s163, 1
        %s304 = sand.u32 %s163, 1
        %s305 = smul.addr %s304, 32
        %s306 = scalar_lea.vmem [#allocation7], %s305
        %p307 = pneg %p204
        %p308 = pneg %p201
        %s309 = sand.u32 %s191, 1
        %s310 = sand.u32 %s191, 1
        %s311 = smul.addr %s310, 32
        %s312 = scalar_lea.vmem [#allocation8], %s311
        %v313 = vld [vmem:[%s273] sm:$0xff]
        %v314 = vld [vmem:[%s1] sm:$0x1]
        %v315 = vld [vmem:[%s2] sm:$0x1]
        %vm316 = vcmask 261120
        %v317 = vsel %vm316, %v313, 0.0
        %318 = vadd.xlane.f32.xlu0 %v317
        %v319 = vpop.xlane.xlu0 %318
        %v320 = vrcp.pop 32.0
        %v321 = vmul.f32 %v319, %v320
        %v322 = vsub.f32 %v313, %v321
        %v323 = vmul.f32 %v322, %v322
        %v324 = vsel %vm316, %v323, 0.0
        %325 = vadd.xlane.f32.xlu0 %v324
        %v326 = vpop.xlane.xlu0 %325
        %v327 = vrcp.pop 31.0
        %v328 = vmul.f32 %v326, %v327
        %v329 = vrsqrt.pop %v328
        %v330 = vmul.f32 %v328, %v329
        %vm331 = vcmp.eq.f32.partialorder %v328, inf
        %v332 = vsel %vm331, %v328, %v330
        %vm333 = vcmp.eq.f32.partialorder %v328, 0.0
        %v334 = vand.u32 %v328, 2147483648
        %v335 = vsel %vm333, %v334, %v332
        %v336 = vadd.f32 %v335, 1e-06
        %v337 = vrcp.pop %v336
        %v338 = vmul.f32 %v322, %v337
        %v340 = vlaneseq
        %v341 = vshrl.u32 %v340, 7
        %v342 = vsub.s32 0, %v341
        %v343 = vrot.slane %v314, %v342
        %v345 = vmul.f32 %v343, %v338
        %v347 = vlaneseq
        %v348 = vshrl.u32 %v347, 7
        %v349 = vsub.s32 0, %v348
        %v350 = vrot.slane %v315, %v349
        %v352 = vadd.f32 %v345, %v350
        %v353 = vld [vmem:[#allocation4] sm:$0xff]
        %v354 = vld [vmem:[#allocation4 + $0x8] sm:$0xff]
        %v355 = vld [vmem:[#allocation4 + $0x10] sm:$0xff]
        %v356 = vld [vmem:[#allocation4 + $0x18] sm:$0xff]
        %v358 = vsel %vm316, %v352, 0
        %360 = vmatprep.subr.mxu0 0.0
        %361 = vmatpush1.msra.mxu0 0.0
        %362 = vmatprep.subr.mxu0 0.0
        %363 = vmatpush1.msra.mxu0 0.0
        %364 = vmatprep.subr.mxu0 0.0
        %365 = vmatpush1.msra.mxu0 0.0
        %366 = vmatprep.subr.mxu0 0.0
        %367 = vmatpush1.msra.mxu0 0.0
        %368 = vmatprep.subr.mxu0 0.0
        %369 = vmatpush1.msra.mxu0 0.0
        %370 = vmatprep.subr.mxu0 0.0
        %371 = vmatpush1.msra.mxu0 0.0
        %372 = vmatprep.subr.mxu0 0.0
        %373 = vmatpush1.msra.mxu0 0.0
        %374 = vmatprep.subr.mxu0 0.0
        %375 = vmatpush1.msra.mxu0 0.0
        %376 = vmatprep.subr.mxu0 0.0
        %377 = vmatpush1.msra.mxu0 0.0
        %378 = vmatprep.subr.mxu0 0.0
        %379 = vmatpush1.msra.mxu0 0.0
        %380 = vmatprep.subr.mxu0 0.0
        %381 = vmatpush1.msra.mxu0 0.0
        %382 = vmatprep.subr.mxu0 0.0
        %383 = vmatpush1.msra.mxu0 0.0
        %384 = vmatprep.subr.mxu0 0.0
        %385 = vmatpush1.msra.mxu0 %v356
        %386 = vmatprep.subr.mxu0 0.0
        %387 = vmatpush1.msra.mxu0 %v355
        %388 = vmatprep.subr.mxu0 0.0
        %389 = vmatpush1.msra.mxu0 %v354
        %390 = vmatprep.subr.mxu0 0.0
        %391 = vmatpush1.msra.mxu0 %v353
        %392 = vmatprep.subr.mxu0 0.0
        %393 = vmatpush2.msra.mxu0 0.0
        %394 = vmatprep.subr.mxu0 0.0
        %395 = vmatpush2.msra.mxu0 0.0
        %396 = vmatprep.subr.mxu0 0.0
        %397 = vmatpush2.msra.mxu0 0.0
        %398 = vmatprep.subr.mxu0 0.0
        %399 = vmatpush2.msra.mxu0 0.0
        %400 = vmatprep.subr.mxu0 0.0
        %401 = vmatpush2.msra.mxu0 0.0
        %402 = vmatprep.subr.mxu0 0.0
        %403 = vmatpush2.msra.mxu0 0.0
        %404 = vmatprep.subr.mxu0 0.0
        %405 = vmatpush2.msra.mxu0 0.0
        %406 = vmatprep.subr.mxu0 0.0
        %407 = vmatpush2.msra.mxu0 0.0
        %408 = vmatprep.subr.mxu0 0.0
        %409 = vmatpush2.msra.mxu0 0.0
        %410 = vmatprep.subr.mxu0 0.0
        %411 = vmatpush2.msra.mxu0 0.0
        %412 = vmatprep.subr.mxu0 0.0
        %413 = vmatpush2.msra.mxu0 0.0
        %414 = vmatprep.subr.mxu0 0.0
        %415 = vmatpush2.msra.mxu0 0.0
        %416 = vmatprep.subr.mxu0 0.0
        %417 = vmatpush2.msra.mxu0 0.0
        %418 = vmatprep.subr.mxu0 0.0
        %419 = vmatpush2.msra.mxu0 0.0
        %420 = vmatprep.subr.mxu0 0.0
        %421 = vmatpush2.msra.mxu0 0.0
        %422 = vmatprep.subr.mxu0 0.0
        %423 = vmatpush2.msra.mxu0 0.0
        %424 = vmatprep.mubr.f32.mxu0 0.0
        %425 = vmatmul.mubr.f32.gmra.mxu0 %v358
        %v426 = vpop.f32.mrf.mxu0
        %v427 = vadd.f32 0.0, %v426
        %v428 = vpop.f32.mrf.mxu0
        %429 = vdwg.mxu0
        %vm430 = vcmask 64512
        %431 = vst.msk [vmem:[%s300] sm:$0xff] %vm430, %v427
        %433 = vrot.lane.b32.xlu0 %v427, 96
        %v434 = vpop.permute.xlu0 %433
        %436 = vst.msk [vmem:[%s306] sm:$0xff] %vm430, %v434
        %437 = vrot.lane.b32.xlu0 %v427, 64
        %v438 = vpop.permute.xlu0 %437
        %440 = vst.msk [vmem:[%s312] sm:$0xff] %vm430, %v438
        %441 = vrot.lane.b32.xlu0 %v427, 120
        %v442 = vpop.permute.xlu0 %441
        %s444 = scalar_lea.vmem %s300, 8 [#allocation6]
        %445 = vst.msk [vmem:[%s444] sm:$0xff] %vm430, %v442
        %446 = vrot.lane.b32.xlu0 %v427, 88
        %v447 = vpop.permute.xlu0 %446
        %s449 = scalar_lea.vmem %s306, 8 [#allocation7]
        %450 = vst.msk [vmem:[%s449] sm:$0xff] %vm430, %v447
        %451 = vrot.lane.b32.xlu0 %v427, 56
        %v452 = vpop.permute.xlu0 %451
        %s454 = scalar_lea.vmem %s312, 8 [#allocation8]
        %455 = vst.msk [vmem:[%s454] sm:$0xff] %vm430, %v452
        %456 = vrot.lane.b32.xlu0 %v427, 112
        %v457 = vpop.permute.xlu0 %456
        %s459 = scalar_lea.vmem %s300, 16 [#allocation6]
        %460 = vst.msk [vmem:[%s459] sm:$0xff] %vm430, %v457
        %461 = vrot.lane.b32.xlu0 %v427, 80
        %v462 = vpop.permute.xlu0 %461
        %s464 = scalar_lea.vmem %s306, 16 [#allocation7]
        %465 = vst.msk [vmem:[%s464] sm:$0xff] %vm430, %v462
        %466 = vrot.lane.b32.xlu0 %v427, 48
        %v467 = vpop.permute.xlu0 %466
        %s469 = scalar_lea.vmem %s312, 16 [#allocation8]
        %470 = vst.msk [vmem:[%s469] sm:$0xff] %vm430, %v467
        %471 = vrot.lane.b32.xlu0 %v427, 104
        %v472 = vpop.permute.xlu0 %471
        %s474 = scalar_lea.vmem %s300, 24 [#allocation6]
        %475 = vst.msk [vmem:[%s474] sm:$0xff] %vm430, %v472
        %476 = vrot.lane.b32.xlu0 %v427, 72
        %v477 = vpop.permute.xlu0 %476
        %s479 = scalar_lea.vmem %s306, 24 [#allocation7]
        %480 = vst.msk [vmem:[%s479] sm:$0xff] %vm430, %v477
        %481 = vrot.lane.b32.xlu0 %v427, 40
        %v482 = vpop.permute.xlu0 %481
        %s484 = scalar_lea.vmem %s312, 24 [#allocation8]
        %485 = vst.msk [vmem:[%s484] sm:$0xff] %vm430, %v482
        %s486 = sand.u32 %s135, 1
        %s487 = sand.u32 %s135, 1
        %s488 = smul.addr %s487, 32
        %s489 = scalar_lea.vmem [#allocation6], %s488
        %s490 = sand.u32 %s163, 1
        %s491 = sand.u32 %s163, 1
        %s492 = smul.addr %s491, 32
        %s493 = scalar_lea.vmem [#allocation7], %s492
        %s494 = sand.u32 %s191, 1
        %s495 = sand.u32 %s191, 1
        %s496 = smul.addr %s495, 32
        %s497 = scalar_lea.vmem [#allocation8], %s496
        // Predicated region
        $region45: #{tpu_custom_call.1} parent=35 // pred_check
          %p498 = pneg %p145
        $region46: #{tpu_custom_call.1} parent=35 // pred_check_branch
          %500 = sbr.rel (%p498) target = $region48
        $region47: #{tpu_custom_call.1} parent=35 // pred_region
          %s501 = smul.addr %s26, 8
          %s502 = sadd.s32 %s27, %s501
          %s503 = smul.addr %s502, 8
          %s504 = scalar_lea.vmem %s4, %s503
          // Predicated region
          $region49: #{tpu_custom_call.1} parent=47 // pred_check
            _
          $region50: #{tpu_custom_call.1} parent=47 // pred_check_branch
            %506 = sbr.rel (0) target = $region52
          $region51: #{tpu_custom_call.1} parent=47 // pred_region
            // Predicated region
            $region53: #{tpu_custom_call.1} parent=51 // pred_check
              _
            $region54: #{tpu_custom_call.1} parent=51 // pred_check_branch
              %508 = sbr.rel (0) target = $region56
            $region55: #{tpu_custom_call.1} parent=51 // pred_region
              // Predicated region
              $region68: #{tpu_custom_call.1} parent=55 // pred_check
                _
              $region69: #{tpu_custom_call.1} parent=55 // pred_check_branch
                %530 = sbr.rel (0) target = $region71
              $region70: #{tpu_custom_call.1} parent=55 // pred_region
                loop: start=0, step=1, limit=1
                $region72: #{tpu_custom_call.1} parent=70 // loop_pre_header
                  _
                $region73: #{tpu_custom_call.1} parent=70 // loop_header
                  %s532 = sphi 0, %s536
                  %p533 = scmp.ge.s32.totalorder %s532, 1
                  %s537 = sphi %s489, %s489
                  %s538 = sphi %s504, %s504
                $region74: #{tpu_custom_call.1} parent=70 // loop_header_branch
                  %535 = sbr.rel (%p533) target = $region78
                $region75: #{tpu_custom_call.1} parent=70 // loop_body
                  %v539 = vld [vmem:[%s537] sm:$0xff]
                  %540 = vst [vmem:[%s538] sm:$0xff] %v539
                  %v541 = vld [vmem:[%s537 + $0x8] sm:$0xff]
                  %542 = vst [vmem:[%s538 + $0x10] sm:$0xff] %v541
                  %v543 = vld [vmem:[%s537 + $0x10] sm:$0xff]
                  %544 = vst [vmem:[%s538 + $0x20] sm:$0xff] %v543
                  %v545 = vld [vmem:[%s537 + $0x18] sm:$0xff]
                  %546 = vst [vmem:[%s538 + $0x30] sm:$0xff] %v545
                $region76: #{tpu_custom_call.1} parent=70 // loop_footer
                  %s536 = sadd.s32 1, %s532
                $region77: #{tpu_custom_call.1} parent=70 // loop_footer_branch
                  %531 = sbr.rel target = $region73
                $region78: #{tpu_custom_call.1} parent=70 // loop_exit
                  _
              $region71: #{tpu_custom_call.1} parent=55 // pred_fallthru
                _
              // Predicated region
              $region79: #{tpu_custom_call.1} parent=55 // pred_check
                _
              $region80: #{tpu_custom_call.1} parent=55 // pred_check_branch
                %548 = sbr.rel target = $region82
              $region81: #{tpu_custom_call.1} parent=55 // pred_region
                _
              $region82: #{tpu_custom_call.1} parent=55 // pred_fallthru
                _
            $region56: #{tpu_custom_call.1} parent=51 // pred_fallthru
              _
            // Predicated region
            $region57: #{tpu_custom_call.1} parent=51 // pred_check
              _
            $region58: #{tpu_custom_call.1} parent=51 // pred_check_branch
              %510 = sbr.rel target = $region60
            $region59: #{tpu_custom_call.1} parent=51 // pred_region
              %s512 = ssub.s32 256, 1
              loop: start=0, step=1, limit=1
              $region61: #{tpu_custom_call.1} parent=59 // loop_pre_header
                _
              $region62: #{tpu_custom_call.1} parent=59 // loop_header
                %s514 = sphi 0, %s518
                %p515 = scmp.ge.s32.totalorder %s514, 1
                %s519 = sphi %s489, %s489
                %s520 = sphi %s504, %s504
              $region63: #{tpu_custom_call.1} parent=59 // loop_header_branch
                %517 = sbr.rel (%p515) target = $region67
              $region64: #{tpu_custom_call.1} parent=59 // loop_body
                %v521 = vld [vmem:[%s519] sm:%s512]
                %522 = vst [vmem:[%s520] sm:%s512] %v521
                %v523 = vld [vmem:[%s519 + $0x8] sm:%s512]
                %524 = vst [vmem:[%s520 + $0x10] sm:%s512] %v523
                %v525 = vld [vmem:[%s519 + $0x10] sm:%s512]
                %526 = vst [vmem:[%s520 + $0x20] sm:%s512] %v525
                %v527 = vld [vmem:[%s519 + $0x18] sm:%s512]
                %528 = vst [vmem:[%s520 + $0x30] sm:%s512] %v527
              $region65: #{tpu_custom_call.1} parent=59 // loop_footer
                %s518 = sadd.s32 1, %s514
              $region66: #{tpu_custom_call.1} parent=59 // loop_footer_branch
                %513 = sbr.rel target = $region62
              $region67: #{tpu_custom_call.1} parent=59 // loop_exit
                _
            $region60: #{tpu_custom_call.1} parent=51 // pred_fallthru
              _
          $region52: #{tpu_custom_call.1} parent=47 // pred_fallthru
            _
          %549 = vnop
        $region48: #{tpu_custom_call.1} parent=35 // pred_fallthru
          _
        // Predicated region
        $region83: #{tpu_custom_call.1} parent=35 // pred_check
          %p550 = pneg %p173
        $region84: #{tpu_custom_call.1} parent=35 // pred_check_branch
          %552 = sbr.rel (%p550) target = $region86
        $region85: #{tpu_custom_call.1} parent=35 // pred_region
          %s553 = smul.addr %s26, 8
          %s554 = sadd.s32 %s27, %s553
          %s555 = smul.addr %s554, 8
          %s556 = scalar_lea.vmem %s5, %s555
          // Predicated region
          $region87: #{tpu_custom_call.1} parent=85 // pred_check
            _
          $region88: #{tpu_custom_call.1} parent=85 // pred_check_branch
            %558 = sbr.rel (0) target = $region90
          $region89: #{tpu_custom_call.1} parent=85 // pred_region
            // Predicated region
            $region91: #{tpu_custom_call.1} parent=89 // pred_check
              _
            $region92: #{tpu_custom_call.1} parent=89 // pred_check_branch
              %560 = sbr.rel (0) target = $region94
            $region93: #{tpu_custom_call.1} parent=89 // pred_region
              // Predicated region
              $region106: #{tpu_custom_call.1} parent=93 // pred_check
                _
              $region107: #{tpu_custom_call.1} parent=93 // pred_check_branch
                %582 = sbr.rel (0) target = $region109
              $region108: #{tpu_custom_call.1} parent=93 // pred_region
                loop: start=0, step=1, limit=1
                $region110: #{tpu_custom_call.1} parent=108 // loop_pre_header
                  _
                $region111: #{tpu_custom_call.1} parent=108 // loop_header
                  %s584 = sphi 0, %s588
                  %p585 = scmp.ge.s32.totalorder %s584, 1
                  %s589 = sphi %s493, %s493
                  %s590 = sphi %s556, %s556
                $region112: #{tpu_custom_call.1} parent=108 // loop_header_branch
                  %587 = sbr.rel (%p585) target = $region116
                $region113: #{tpu_custom_call.1} parent=108 // loop_body
                  %v591 = vld [vmem:[%s589] sm:$0xff]
                  %592 = vst [vmem:[%s590] sm:$0xff] %v591
                  %v593 = vld [vmem:[%s589 + $0x8] sm:$0xff]
                  %594 = vst [vmem:[%s590 + $0x10] sm:$0xff] %v593
                  %v595 = vld [vmem:[%s589 + $0x10] sm:$0xff]
                  %596 = vst [vmem:[%s590 + $0x20] sm:$0xff] %v595
                  %v597 = vld [vmem:[%s589 + $0x18] sm:$0xff]
                  %598 = vst [vmem:[%s590 + $0x30] sm:$0xff] %v597
                $region114: #{tpu_custom_call.1} parent=108 // loop_footer
                  %s588 = sadd.s32 1, %s584
                $region115: #{tpu_custom_call.1} parent=108 // loop_footer_branch
                  %583 = sbr.rel target = $region111
                $region116: #{tpu_custom_call.1} parent=108 // loop_exit
                  _
              $region109: #{tpu_custom_call.1} parent=93 // pred_fallthru
                _
              // Predicated region
              $region117: #{tpu_custom_call.1} parent=93 // pred_check
                _
              $region118: #{tpu_custom_call.1} parent=93 // pred_check_branch
                %600 = sbr.rel target = $region120
              $region119: #{tpu_custom_call.1} parent=93 // pred_region
                _
              $region120: #{tpu_custom_call.1} parent=93 // pred_fallthru
                _
            $region94: #{tpu_custom_call.1} parent=89 // pred_fallthru
              _
            // Predicated region
            $region95: #{tpu_custom_call.1} parent=89 // pred_check
              _
            $region96: #{tpu_custom_call.1} parent=89 // pred_check_branch
              %562 = sbr.rel target = $region98
            $region97: #{tpu_custom_call.1} parent=89 // pred_region
              %s564 = ssub.s32 256, 1
              loop: start=0, step=1, limit=1
              $region99: #{tpu_custom_call.1} parent=97 // loop_pre_header
                _
              $region100: #{tpu_custom_call.1} parent=97 // loop_header
                %s566 = sphi 0, %s570
                %p567 = scmp.ge.s32.totalorder %s566, 1
                %s571 = sphi %s493, %s493
                %s572 = sphi %s556, %s556
              $region101: #{tpu_custom_call.1} parent=97 // loop_header_branch
                %569 = sbr.rel (%p567) target = $region105
              $region102: #{tpu_custom_call.1} parent=97 // loop_body
                %v573 = vld [vmem:[%s571] sm:%s564]
                %574 = vst [vmem:[%s572] sm:%s564] %v573
                %v575 = vld [vmem:[%s571 + $0x8] sm:%s564]
                %576 = vst [vmem:[%s572 + $0x10] sm:%s564] %v575
                %v577 = vld [vmem:[%s571 + $0x10] sm:%s564]
                %578 = vst [vmem:[%s572 + $0x20] sm:%s564] %v577
                %v579 = vld [vmem:[%s571 + $0x18] sm:%s564]
                %580 = vst [vmem:[%s572 + $0x30] sm:%s564] %v579
              $region103: #{tpu_custom_call.1} parent=97 // loop_footer
                %s570 = sadd.s32 1, %s566
              $region104: #{tpu_custom_call.1} parent=97 // loop_footer_branch
                %565 = sbr.rel target = $region100
              $region105: #{tpu_custom_call.1} parent=97 // loop_exit
                _
            $region98: #{tpu_custom_call.1} parent=89 // pred_fallthru
              _
          $region90: #{tpu_custom_call.1} parent=85 // pred_fallthru
            _
          %601 = vnop
        $region86: #{tpu_custom_call.1} parent=35 // pred_fallthru
          _
        // Predicated region
        $region121: #{tpu_custom_call.1} parent=35 // pred_check
          %p602 = pneg %p201
        $region122: #{tpu_custom_call.1} parent=35 // pred_check_branch
          %604 = sbr.rel (%p602) target = $region124
        $region123: #{tpu_custom_call.1} parent=35 // pred_region
          %s605 = smul.addr %s26, 8
          %s606 = sadd.s32 %s27, %s605
          %s607 = smul.addr %s606, 8
          %s608 = scalar_lea.vmem %s6, %s607
          // Predicated region
          $region125: #{tpu_custom_call.1} parent=123 // pred_check
            _
          $region126: #{tpu_custom_call.1} parent=123 // pred_check_branch
            %610 = sbr.rel (0) target = $region128
          $region127: #{tpu_custom_call.1} parent=123 // pred_region
            // Predicated region
            $region129: #{tpu_custom_call.1} parent=127 // pred_check
              _
            $region130: #{tpu_custom_call.1} parent=127 // pred_check_branch
              %612 = sbr.rel (0) target = $region132
            $region131: #{tpu_custom_call.1} parent=127 // pred_region
              // Predicated region
              $region144: #{tpu_custom_call.1} parent=131 // pred_check
                _
              $region145: #{tpu_custom_call.1} parent=131 // pred_check_branch
                %634 = sbr.rel (0) target = $region147
              $region146: #{tpu_custom_call.1} parent=131 // pred_region
                loop: start=0, step=1, limit=1
                $region148: #{tpu_custom_call.1} parent=146 // loop_pre_header
                  _
                $region149: #{tpu_custom_call.1} parent=146 // loop_header
                  %s636 = sphi 0, %s640
                  %p637 = scmp.ge.s32.totalorder %s636, 1
                  %s641 = sphi %s497, %s497
                  %s642 = sphi %s608, %s608
                $region150: #{tpu_custom_call.1} parent=146 // loop_header_branch
                  %639 = sbr.rel (%p637) target = $region154
                $region151: #{tpu_custom_call.1} parent=146 // loop_body
                  %v643 = vld [vmem:[%s641] sm:$0xff]
                  %644 = vst [vmem:[%s642] sm:$0xff] %v643
                  %v645 = vld [vmem:[%s641 + $0x8] sm:$0xff]
                  %646 = vst [vmem:[%s642 + $0x10] sm:$0xff] %v645
                  %v647 = vld [vmem:[%s641 + $0x10] sm:$0xff]
                  %648 = vst [vmem:[%s642 + $0x20] sm:$0xff] %v647
                  %v649 = vld [vmem:[%s641 + $0x18] sm:$0xff]
                  %650 = vst [vmem:[%s642 + $0x30] sm:$0xff] %v649
                $region152: #{tpu_custom_call.1} parent=146 // loop_footer
                  %s640 = sadd.s32 1, %s636
                $region153: #{tpu_custom_call.1} parent=146 // loop_footer_branch
                  %635 = sbr.rel target = $region149
                $region154: #{tpu_custom_call.1} parent=146 // loop_exit
                  _
              $region147: #{tpu_custom_call.1} parent=131 // pred_fallthru
                _
              // Predicated region
              $region155: #{tpu_custom_call.1} parent=131 // pred_check
                _
              $region156: #{tpu_custom_call.1} parent=131 // pred_check_branch
                %652 = sbr.rel target = $region158
              $region157: #{tpu_custom_call.1} parent=131 // pred_region
                _
              $region158: #{tpu_custom_call.1} parent=131 // pred_fallthru
                _
            $region132: #{tpu_custom_call.1} parent=127 // pred_fallthru
              _
            // Predicated region
            $region133: #{tpu_custom_call.1} parent=127 // pred_check
              _
            $region134: #{tpu_custom_call.1} parent=127 // pred_check_branch
              %614 = sbr.rel target = $region136
            $region135: #{tpu_custom_call.1} parent=127 // pred_region
              %s616 = ssub.s32 256, 1
              loop: start=0, step=1, limit=1
              $region137: #{tpu_custom_call.1} parent=135 // loop_pre_header
                _
              $region138: #{tpu_custom_call.1} parent=135 // loop_header
                %s618 = sphi 0, %s622
                %p619 = scmp.ge.s32.totalorder %s618, 1
                %s623 = sphi %s497, %s497
                %s624 = sphi %s608, %s608
              $region139: #{tpu_custom_call.1} parent=135 // loop_header_branch
                %621 = sbr.rel (%p619) target = $region143
              $region140: #{tpu_custom_call.1} parent=135 // loop_body
                %v625 = vld [vmem:[%s623] sm:%s616]
                %626 = vst [vmem:[%s624] sm:%s616] %v625
                %v627 = vld [vmem:[%s623 + $0x8] sm:%s616]
                %628 = vst [vmem:[%s624 + $0x10] sm:%s616] %v627
                %v629 = vld [vmem:[%s623 + $0x10] sm:%s616]
                %630 = vst [vmem:[%s624 + $0x20] sm:%s616] %v629
                %v631 = vld [vmem:[%s623 + $0x18] sm:%s616]
                %632 = vst [vmem:[%s624 + $0x30] sm:%s616] %v631
              $region141: #{tpu_custom_call.1} parent=135 // loop_footer
                %s622 = sadd.s32 1, %s618
              $region142: #{tpu_custom_call.1} parent=135 // loop_footer_branch
                %617 = sbr.rel target = $region138
              $region143: #{tpu_custom_call.1} parent=135 // loop_exit
                _
            $region136: #{tpu_custom_call.1} parent=127 // pred_fallthru
              _
          $region128: #{tpu_custom_call.1} parent=123 // pred_fallthru
            _
          %653 = vnop
        $region124: #{tpu_custom_call.1} parent=35 // pred_fallthru
          _
      $region36: #{tpu_custom_call.1} parent=5 // pred_fallthru
        _
      %p654 = scmp.le.s32.totalorder 2, %s17
      // Predicated region
      $region159: #{tpu_custom_call.1} parent=5 // pred_check
        %p655 = pneg %p654
      $region160: #{tpu_custom_call.1} parent=5 // pred_check_branch
        %657 = sbr.rel (%p655) target = $region162
      $region161: #{tpu_custom_call.1} parent=5 // pred_region
        %s658 = ssub.s32 %s17, 2
        // Predicated region
        $region163: #{tpu_custom_call.1} parent=161 // pred_check
          %p659 = pneg %p151
        $region164: #{tpu_custom_call.1} parent=161 // pred_check_branch
          %661 = sbr.rel (%p659) target = $region166
        $region165: #{tpu_custom_call.1} parent=161 // pred_region
          %s662 = sand.u32 %s136, 1
          %s663 = sand.u32 %s136, 1
          %s664 = smul.addr %s663, 32
          %s665 = scalar_lea.vmem [#allocation6], %s664
        $region166: #{tpu_custom_call.1} parent=161 // pred_fallthru
          _
        // Predicated region
        $region167: #{tpu_custom_call.1} parent=161 // pred_check
          %p666 = pneg %p179
        $region168: #{tpu_custom_call.1} parent=161 // pred_check_branch
          %668 = sbr.rel (%p666) target = $region170
        $region169: #{tpu_custom_call.1} parent=161 // pred_region
          %s669 = sand.u32 %s164, 1
          %s670 = sand.u32 %s164, 1
          %s671 = smul.addr %s670, 32
          %s672 = scalar_lea.vmem [#allocation7], %s671
        $region170: #{tpu_custom_call.1} parent=161 // pred_fallthru
          _
        // Predicated region
        $region171: #{tpu_custom_call.1} parent=161 // pred_check
          %p673 = pneg %p207
        $region172: #{tpu_custom_call.1} parent=161 // pred_check_branch
          %675 = sbr.rel (%p673) target = $region174
        $region173: #{tpu_custom_call.1} parent=161 // pred_region
          %s676 = sand.u32 %s192, 1
          %s677 = sand.u32 %s192, 1
          %s678 = smul.addr %s677, 32
          %s679 = scalar_lea.vmem [#allocation8], %s678
        $region174: #{tpu_custom_call.1} parent=161 // pred_fallthru
          _
      $region162: #{tpu_custom_call.1} parent=5 // pred_fallthru
        _
    $region6: #{tpu_custom_call.1} parent=1 // loop_footer
      %s21 = sadd.s32 1, %s17
    $region7: #{tpu_custom_call.1} parent=1 // loop_footer_branch
      %16 = sbr.rel target = $region3
    $region8: #{tpu_custom_call.1} parent=1 // loop_exit
      _
    %680 = vsyncpa [#allocation3], 1
    %s681 = scalar_lea.sflag [#allocation3], 1
    %682 = vsyncpa %s681, 1
    %683 = vsyncpa [#allocation5], 1

// kernel: tpu_custom_call.1
$region0: #{tpu_custom_call.1}
  #allocation0 [shape = 'u32[]', space=smem, size = 0x4, offset = 0x4, fixed_abs, tag = 'smem constant byte address 0x4 - core index']
  #allocation1 [shape = 'u32[144,128]{1,0:T(1,128)}', space=vmem, size = 0x12000, scoped, tag = 'internal scratch']
  %s0 = inlined_call_operand.hbm [shape: f32[2,16,32], index: 0, kind: input, shape index: {}]
  %s1 = inlined_call_operand.vmem [shape: f32[1,32], index: 1, kind: input, shape index: {}]
  %s2 = inlined_call_operand.vmem [shape: f32[1,32], index: 2, kind: input, shape index: {}]
  %s3 = inlined_call_operand.hbm [shape: f32[32,96], index: 3, kind: input, shape index: {}]
  %s4 = inlined_call_operand.vmem [shape: f32[2,4,16,8], index: 4, kind: output, shape index: {0}]
  %s5 = inlined_call_operand.vmem [shape: f32[2,4,16,8], index: 5, kind: output, shape index: {1}]
  %s6 = inlined_call_operand.vmem [shape: f32[2,4,16,8], index: 6, kind: output, shape index: {2}]
  %7 = xla_tuple %s4, %s5, %s6
  %s8 = sld [smem:[#allocation0]]
  $region175: #{tpu_custom_call.1} parent=0
    _
  %s10 = ssub.s32 1, %s8
  %s11 = scalar_select 0, %s10, %s8
  $region1: #{tpu_custom_call.1} parent=0
    #allocation2 [shape = 'u8[8192]{0}', space=vmem, size = 0x2000, scoped, tag = 'input window, operand 0']
    #allocation3 [shape = 's32[2]{0}', space=sflag, size = 0x8, scoped, tag = 'scoped memory for tpu_custom_call.1']
    #allocation4 [shape = 'u8[16384]{0}', space=vmem, size = 0x4000, scoped, tag = 'input window, operand 3, single buffered']
    #allocation5 [shape = 's32[1]{0}', space=sflag, size = 0x4, scoped, tag = 'scoped memory for tpu_custom_call.1']
    #allocation6 [shape = 'u8[32768]{0}', space=vmem, size = 0x8000, scoped, tag = 'output window, operand 0']
    #allocation7 [shape = 'u8[32768]{0}', space=vmem, size = 0x8000, scoped, tag = 'output window, operand 1']
    #allocation8 [shape = 'u8[32768]{0}', space=vmem, size = 0x8000, scoped, tag = 'output window, operand 2']
    %12 = vsyncpa [#allocation3], 0
    %s13 = scalar_lea.sflag [#allocation3], 1
    %14 = vsyncpa %s13, 0
    %15 = vsyncpa [#allocation5], 0
    loop: start=0, step=1, limit=6
    $region2: #{tpu_custom_call.1} parent=1 // loop_pre_header
      _
    $region3: #{tpu_custom_call.1} parent=1 // loop_header
      %s17 = sphi 0, %s21
      %p18 = scmp.ge.s32.totalorder %s17, 6
      %s24 = sphi 0, %s36
      %s25 = sphi 0, %s32
      %s26 = sphi 0, %s24
      %s27 = sphi 0, %s25
      %s28 = sphi 0, %s26
      %s29 = sphi 0, %s27
      %s41 = sphi 0, %s43
      %s44 = sphi 0, %s41
      %s45 = sphi 0, %s44
      %s61 = sphi 0, %s45
      %s65 = sphi 0, %s65
      %s67 = sphi 0, %s65
      %s68 = sphi 0, %s67
      %s82 = sphi 0, %s68
      %s86 = sphi 0, %s86
      %s88 = sphi 0, %s86
      %s89 = sphi 0, %s88
      %s103 = sphi 0, %s89
      %s107 = sphi 0, %s107
      %s109 = sphi 0, %s107
      %s110 = sphi 0, %s109
      %s124 = sphi 0, %s110
      %s132 = sphi 0, %s134
      %s135 = sphi 0, %s132
      %s136 = sphi 0, %s135
      %s152 = sphi 0, %s136
      %s160 = sphi 0, %s162
      %s163 = sphi 0, %s160
      %s164 = sphi 0, %s163
      %s180 = sphi 0, %s164
      %s188 = sphi 0, %s190
      %s191 = sphi 0, %s188
      %s192 = sphi 0, %s191
      %s208 = sphi 0, %s192
    $region4: #{tpu_custom_call.1} parent=1 // loop_header_branch
      %20 = sbr.rel (%p18) target = $region8
    $region5: #{tpu_custom_call.1} parent=1 // loop_body
      %s22 = ssub.s32 %s17, 1
      %s23 = ssub.s32 %s17, 2
      %s30 = sadd.s32 1, %s25
      %p31 = scmp.ge.s32.totalorder %s30, 2
      %s32 = scalar_select %p31, 0, %s30
      %s33 = sadd.s32 1, %s24
      %s34 = scalar_select %p31, %s33, %s24
      %p35 = scmp.ge.s32.totalorder %s34, 2
      %s36 = scalar_select %p35, 0, %s34
      %s37 = ssub.s32 %s24, %s36
      %s38 = ssub.s32 %s25, %s32
      %s39 = sor.u32 %s37, %s38
      %p40 = scmp.eq.s32.totalorder %s39, 0
      %s42 = sadd.s32 %s41, 1
      %s43 = scalar_select %p40, %s41, %s42
      %p46 = pneg %p40
      %p47 = scmp.eq.s32.totalorder %s17, 3
      %p48 = por %p46, %p47
      %p49 = scmp.ne.s32.totalorder %s41, %s44
      %p50 = scmp.eq.s32.totalorder %s17, 0
      %p51 = por %p49, %p50
      %p52 = scmp.ne.s32.totalorder %s41, %s44
      %p53 = scmp.eq.s32.totalorder %s22, 3
      %p54 = por %p52, %p53
      %p55 = scmp.ne.s32.totalorder %s44, %s45
      %p56 = scmp.eq.s32.totalorder %s22, 0
      %p57 = por %p55, %p56
      %p58 = scmp.ne.s32.totalorder %s44, %s45
      %p59 = scmp.eq.s32.totalorder %s23, 3
      %p60 = por %p58, %p59
      %p62 = scmp.ne.s32.totalorder %s45, %s61
      %p63 = scmp.eq.s32.totalorder %s23, 0
      %p64 = por %p62, %p63
      %s66 = sadd.s32 %s65, 1
      %p69 = scmp.eq.s32.totalorder %s17, 3
      %p70 = scmp.ne.s32.totalorder %s65, %s67
      %p71 = scmp.eq.s32.totalorder %s17, 0
      %p72 = por %p70, %p71
      %p73 = scmp.ne.s32.totalorder %s65, %s67
      %p74 = scmp.eq.s32.totalorder %s22, 3
      %p75 = por %p73, %p74
      %p76 = scmp.ne.s32.totalorder %s67, %s68
      %p77 = scmp.eq.s32.totalorder %s22, 0
      %p78 = por %p76, %p77
      %p79 = scmp.ne.s32.totalorder %s67, %s68
      %p80 = scmp.eq.s32.totalorder %s23, 3
      %p81 = por %p79, %p80
      %p83 = scmp.ne.s32.totalorder %s68, %s82
      %p84 = scmp.eq.s32.totalorder %s23, 0
      %p85 = por %p83, %p84
      %s87 = sadd.s32 %s86, 1
      %p90 = scmp.eq.s32.totalorder %s17, 3
      %p91 = scmp.ne.s32.totalorder %s86, %s88
      %p92 = scmp.eq.s32.totalorder %s17, 0
      %p93 = por %p91, %p92
      %p94 = scmp.ne.s32.totalorder %s86, %s88
      %p95 = scmp.eq.s32.totalorder %s22, 3
      %p96 = por %p94, %p95
      %p97 = scmp.ne.s32.totalorder %s88, %s89
      %p98 = scmp.eq.s32.totalorder %s22, 0
      %p99 = por %p97, %p98
      %p100 = scmp.ne.s32.totalorder %s88, %s89
      %p101 = scmp.eq.s32.totalorder %s23, 3
      %p102 = por %p100, %p101
      %p104 = scmp.ne.s32.totalorder %s89, %s103
      %p105 = scmp.eq.s32.totalorder %s23, 0
      %p106 = por %p104, %p105
      %s108 = sadd.s32 %s107, 1
      %p111 = scmp.eq.s32.totalorder %s17, 3
      %p112 = scmp.ne.s32.totalorder %s107, %s109
      %p113 = scmp.eq.s32.totalorder %s17, 0
      %p114 = por %p112, %p113
      %p115 = scmp.ne.s32.totalorder %s107, %s109
      %p116 = scmp.eq.s32.totalorder %s22, 3
      %p117 = por %p115, %p116
      %p118 = scmp.ne.s32.totalorder %s109, %s110
      %p119 = scmp.eq.s32.totalorder %s22, 0
      %p120 = por %p118, %p119
      %p121 = scmp.ne.s32.totalorder %s109, %s110
      %p122 = scmp.eq.s32.totalorder %s23, 3
      %p123 = por %p121, %p122
      %p125 = scmp.ne.s32.totalorder %s110, %s124
      %p126 = scmp.eq.s32.totalorder %s23, 0
      %p127 = por %p125, %p126
      %s128 = ssub.s32 %s24, %s36
      %s129 = ssub.s32 %s25, %s32
      %s130 = sor.u32 %s128, %s129
      %p131 = scmp.eq.s32.totalorder %s130, 0
      %s133 = sadd.s32 %s132, 1
      %s134 = scalar_select %p131, %s132, %s133
      %p137 = pneg %p131
      %p138 = scmp.eq.s32.totalorder %s17, 3
      %p139 = por %p137, %p138
      %p140 = scmp.ne.s32.totalorder %s132, %s135
      %p141 = scmp.eq.s32.totalorder %s17, 0
      %p142 = por %p140, %p141
      %p143 = scmp.ne.s32.totalorder %s132, %s135
      %p144 = scmp.eq.s32.totalorder %s22, 3
      %p145 = por %p143, %p144
      %p146 = scmp.ne.s32.totalorder %s135, %s136
      %p147 = scmp.eq.s32.totalorder %s22, 0
      %p148 = por %p146, %p147
      %p149 = scmp.ne.s32.totalorder %s135, %s136
      %p150 = scmp.eq.s32.totalorder %s23, 3
      %p151 = por %p149, %p150
      %p153 = scmp.ne.s32.totalorder %s136, %s152
      %p154 = scmp.eq.s32.totalorder %s23, 0
      %p155 = por %p153, %p154
      %s156 = ssub.s32 %s24, %s36
      %s157 = ssub.s32 %s25, %s32
      %s158 = sor.u32 %s156, %s157
      %p159 = scmp.eq.s32.totalorder %s158, 0
      %s161 = sadd.s32 %s160, 1
      %s162 = scalar_select %p159, %s160, %s161
      %p165 = pneg %p159
      %p166 = scmp.eq.s32.totalorder %s17, 3
      %p167 = por %p165, %p166
      %p168 = scmp.ne.s32.totalorder %s160, %s163
      %p169 = scmp.eq.s32.totalorder %s17, 0
      %p170 = por %p168, %p169
      %p171 = scmp.ne.s32.totalorder %s160, %s163
      %p172 = scmp.eq.s32.totalorder %s22, 3
      %p173 = por %p171, %p172
      %p174 = scmp.ne.s32.totalorder %s163, %s164
      %p175 = scmp.eq.s32.totalorder %s22, 0
      %p176 = por %p174, %p175
      %p177 = scmp.ne.s32.totalorder %s163, %s164
      %p178 = scmp.eq.s32.totalorder %s23, 3
      %p179 = por %p177, %p178
      %p181 = scmp.ne.s32.totalorder %s164, %s180
      %p182 = scmp.eq.s32.totalorder %s23, 0
      %p183 = por %p181, %p182
      %s184 = ssub.s32 %s24, %s36
      %s185 = ssub.s32 %s25, %s32
      %s186 = sor.u32 %s184, %s185
      %p187 = scmp.eq.s32.totalorder %s186, 0
      %s189 = sadd.s32 %s188, 1
      %s190 = scalar_select %p187, %s188, %s189
      %p193 = pneg %p187
      %p194 = scmp.eq.s32.totalorder %s17, 3
      %p195 = por %p193, %p194
      %p196 = scmp.ne.s32.totalorder %s188, %s191
      %p197 = scmp.eq.s32.totalorder %s17, 0
      %p198 = por %p196, %p197
      %p199 = scmp.ne.s32.totalorder %s188, %s191
      %p200 = scmp.eq.s32.totalorder %s22, 3
      %p201 = por %p199, %p200
      %p202 = scmp.ne.s32.totalorder %s191, %s192
      %p203 = scmp.eq.s32.totalorder %s22, 0
      %p204 = por %p202, %p203
      %p205 = scmp.ne.s32.totalorder %s191, %s192
      %p206 = scmp.eq.s32.totalorder %s23, 3
      %p207 = por %p205, %p206
      %p209 = scmp.ne.s32.totalorder %s192, %s208
      %p210 = scmp.eq.s32.totalorder %s23, 0
      %p211 = por %p209, %p210
      %p212 = scmp.le.s32.totalorder 1, %s17
      %p213 = scmp.lt.s32.totalorder %s17, 5
      %p214 = pnand %p212, %p213
      %p215 = pneg %p214
      // Predicated region
      $region9: #{tpu_custom_call.1} parent=5 // pred_check
        _
      $region10: #{tpu_custom_call.1} parent=5 // pred_check_branch
        %217 = sbr.rel (%p214) target = $region12
      $region11: #{tpu_custom_call.1} parent=5 // pred_region
        %s218 = ssub.s32 %s17, 1
        // Predicated region
        $region13: #{tpu_custom_call.1} parent=11 // pred_check
          %p219 = pneg %p78
        $region14: #{tpu_custom_call.1} parent=11 // pred_check_branch
          %221 = sbr.rel (%p219) target = $region16
        $region15: #{tpu_custom_call.1} parent=11 // pred_region
          _
        $region16: #{tpu_custom_call.1} parent=11 // pred_fallthru
          _
        // Predicated region
        $region17: #{tpu_custom_call.1} parent=11 // pred_check
          %p222 = pneg %p99
        $region18: #{tpu_custom_call.1} parent=11 // pred_check_branch
          %224 = sbr.rel (%p222) target = $region20
        $region19: #{tpu_custom_call.1} parent=11 // pred_region
          _
        $region20: #{tpu_custom_call.1} parent=11 // pred_fallthru
          _
        // Predicated region
        $region21: #{tpu_custom_call.1} parent=11 // pred_check
          %p225 = pneg %p120
        $region22: #{tpu_custom_call.1} parent=11 // pred_check_branch
          %227 = sbr.rel (%p225) target = $region24
        $region23: #{tpu_custom_call.1} parent=11 // pred_region
          %s229 = ssub.s32 512, 512
          %230 = vsyncadd [#allocation5], %s229
          %s231 = sshll.u32 [#allocation4], 4
          %s232 = int_to_ptr.vmem [resolvable:$true] %s231
          %237 = dma.hbm_to_vmem [thread:$0]  %s3, 512, %s232, [#allocation5], 128, 128, 8
        $region24: #{tpu_custom_call.1} parent=11 // pred_fallthru
          _
      $region12: #{tpu_custom_call.1} parent=5 // pred_fallthru
        _
      %p238 = scmp.lt.s32.totalorder %s17, 4
      // Predicated region
      $region25: #{tpu_custom_call.1} parent=5 // pred_check
        %p239 = pneg %p238
      $region26: #{tpu_custom_call.1} parent=5 // pred_check_branch
        %241 = sbr.rel (%p239) target = $region28
      $region27: #{tpu_custom_call.1} parent=5 // pred_region
        // Predicated region
        $region29: #{tpu_custom_call.1} parent=27 // pred_check
          %p242 = pneg %p51
        $region30: #{tpu_custom_call.1} parent=27 // pred_check_branch
          %244 = sbr.rel (%p242) target = $region32
        $region31: #{tpu_custom_call.1} parent=27 // pred_region
          %s245 = sand.u32 %s41, 1
          %s246 = scalar_lea.sflag [#allocation3], %s245
          %s247 = sand.u32 %s41, 1
          %s248 = smul.addr %s247, 8
          %s249 = scalar_lea.vmem [#allocation2], %s248
          %s251 = ssub.s32 128, 128
          %252 = vsyncadd %s246, %s251
          %s253 = smul.addr %s24, 2
          %s254 = sadd.s32 %s25, %s253
          %s255 = smul.addr %s254, 128
          %s256 = scalar_lea.hbm %s0, %s255
          %s258 = sshll.u32 %s249, 4
          %s259 = int_to_ptr.vmem [resolvable:$true] %s258
          %261 = dma.hbm_to_vmem [thread:$0]  %s256, 128, %s259, %s246
        $region32: #{tpu_custom_call.1} parent=27 // pred_fallthru
          _
      $region28: #{tpu_custom_call.1} parent=5 // pred_fallthru
        _
      %p262 = scmp.le.s32.totalorder 1, %s17
      %p263 = scmp.lt.s32.totalorder %s17, 5
      %p264 = pnand %p262, %p263
      %p265 = pneg %p264
      // Predicated region
      $region33: #{tpu_custom_call.1} parent=5 // pred_check
        _
      $region34: #{tpu_custom_call.1} parent=5 // pred_check_branch
        %267 = sbr.rel (%p264) target = $region36
      $region35: #{tpu_custom_call.1} parent=5 // pred_region
        %s268 = ssub.s32 %s17, 1
        %s269 = sand.u32 %s44, 1
        %s270 = scalar_lea.sflag [#allocation3], %s269
        %s271 = sand.u32 %s44, 1
        %s272 = smul.addr %s271, 8
        %s273 = scalar_lea.vmem [#allocation2], %s272
        // Predicated region
        $region37: #{tpu_custom_call.1} parent=35 // pred_check
          %p274 = pneg %p57
        $region38: #{tpu_custom_call.1} parent=35 // pred_check_branch
          %276 = sbr.rel (%p274) target = $region40
        $region39: #{tpu_custom_call.1} parent=35 // pred_region
          %277 = dma.done %s270, 128
        $region40: #{tpu_custom_call.1} parent=35 // pred_fallthru
          _
        // Predicated region
        $region41: #{tpu_custom_call.1} parent=35 // pred_check
          %p278 = pneg %p120
        $region42: #{tpu_custom_call.1} parent=35 // pred_check_branch
          %280 = sbr.rel (%p278) target = $region44
        $region43: #{tpu_custom_call.1} parent=35 // pred_region
          %281 = dma.done [#allocation5], 512
        $region44: #{tpu_custom_call.1} parent=35 // pred_fallthru
          _
        %s282 = sand.u32 %s44, 1
        %s283 = scalar_lea.sflag [#allocation3], %s282
        %s284 = sand.u32 %s44, 1
        %s285 = smul.addr %s284, 8
        %s286 = scalar_lea.vmem [#allocation2], %s285
        %p287 = pneg %p57
        %p288 = pneg %p54
        %p289 = pneg %p78
        %p290 = pneg %p75
        %p291 = pneg %p99
        %p292 = pneg %p96
        %p293 = pneg %p120
        %p294 = pneg %p117
        %p295 = pneg %p148
        %p296 = pneg %p145
        %s297 = sand.u32 %s135, 1
        %s298 = sand.u32 %s135, 1
        %s299 = smul.addr %s298, 32
        %s300 = scalar_lea.vmem [#allocation6], %s299
        %p301 = pneg %p176
        %p302 = pneg %p173
        %s303 = sand.u32 %s163, 1
        %s304 = sand.u32 %s163, 1
        %s305 = smul.addr %s304, 32
        %s306 = scalar_lea.vmem [#allocation7], %s305
        %p307 = pneg %p204
        %p308 = pneg %p201
        %s309 = sand.u32 %s191, 1
        %s310 = sand.u32 %s191, 1
        %s311 = smul.addr %s310, 32
        %s312 = scalar_lea.vmem [#allocation8], %s311
        %v313 = vld [vmem:[%s273] sm:$0xff]
        %v314 = vld [vmem:[%s1] sm:$0x1]
        %v315 = vld [vmem:[%s2] sm:$0x1]
        %vm316 = vcmask 261120
        %v317 = vsel %vm316, %v313, 0.0
        %318 = vadd.xlane.f32.xlu0 %v317
        %v319 = vpop.xlane.xlu0 %318
        %v320 = vrcp.pop 32.0
        %v321 = vmul.f32 %v319, %v320
        %v322 = vsub.f32 %v313, %v321
        %v323 = vmul.f32 %v322, %v322
        %v324 = vsel %vm316, %v323, 0.0
        %325 = vadd.xlane.f32.xlu0 %v324
        %v326 = vpop.xlane.xlu0 %325
        %v327 = vrcp.pop 31.0
        %v328 = vmul.f32 %v326, %v327
        %v329 = vrsqrt.pop %v328
        %v330 = vmul.f32 %v328, %v329
        %vm331 = vcmp.eq.f32.partialorder %v328, inf
        %v332 = vsel %vm331, %v328, %v330
        %vm333 = vcmp.eq.f32.partialorder %v328, 0.0
        %v334 = vand.u32 %v328, 2147483648
        %v335 = vsel %vm333, %v334, %v332
        %v336 = vadd.f32 %v335, 1e-06
        %v337 = vrcp.pop %v336
        %v338 = vmul.f32 %v322, %v337
        %v340 = vlaneseq
        %v341 = vshrl.u32 %v340, 7
        %v342 = vsub.s32 0, %v341
        %v343 = vrot.slane %v314, %v342
        %v345 = vmul.f32 %v343, %v338
        %v347 = vlaneseq
        %v348 = vshrl.u32 %v347, 7
        %v349 = vsub.s32 0, %v348
        %v350 = vrot.slane %v315, %v349
        %v352 = vadd.f32 %v345, %v350
        %v353 = vld [vmem:[#allocation4] sm:$0xff]
        %v354 = vld [vmem:[#allocation4 + $0x8] sm:$0xff]
        %v355 = vld [vmem:[#allocation4 + $0x10] sm:$0xff]
        %v356 = vld [vmem:[#allocation4 + $0x18] sm:$0xff]
        %v358 = vsel %vm316, %v352, 0
        %360 = vmatprep.subr.mxu0 0.0
        %361 = vmatpush1.msra.mxu0 0.0
        %362 = vmatprep.subr.mxu0 0.0
        %363 = vmatpush1.msra.mxu0 0.0
        %364 = vmatprep.subr.mxu0 0.0
        %365 = vmatpush1.msra.mxu0 0.0
        %366 = vmatprep.subr.mxu0 0.0
        %367 = vmatpush1.msra.mxu0 0.0
        %368 = vmatprep.subr.mxu0 0.0
        %369 = vmatpush1.msra.mxu0 0.0
        %370 = vmatprep.subr.mxu0 0.0
        %371 = vmatpush1.msra.mxu0 0.0
        %372 = vmatprep.subr.mxu0 0.0
        %373 = vmatpush1.msra.mxu0 0.0
        %374 = vmatprep.subr.mxu0 0.0
        %375 = vmatpush1.msra.mxu0 0.0
        %376 = vmatprep.subr.mxu0 0.0
        %377 = vmatpush1.msra.mxu0 0.0
        %378 = vmatprep.subr.mxu0 0.0
        %379 = vmatpush1.msra.mxu0 0.0
        %380 = vmatprep.subr.mxu0 0.0
        %381 = vmatpush1.msra.mxu0 0.0
        %382 = vmatprep.subr.mxu0 0.0
        %383 = vmatpush1.msra.mxu0 0.0
        %384 = vmatprep.subr.mxu0 0.0
        %385 = vmatpush1.msra.mxu0 %v356
        %386 = vmatprep.subr.mxu0 0.0
        %387 = vmatpush1.msra.mxu0 %v355
        %388 = vmatprep.subr.mxu0 0.0
        %389 = vmatpush1.msra.mxu0 %v354
        %390 = vmatprep.subr.mxu0 0.0
        %391 = vmatpush1.msra.mxu0 %v353
        %392 = vmatprep.subr.mxu0 0.0
        %393 = vmatpush2.msra.mxu0 0.0
        %394 = vmatprep.subr.mxu0 0.0
        %395 = vmatpush2.msra.mxu0 0.0
        %396 = vmatprep.subr.mxu0 0.0
        %397 = vmatpush2.msra.mxu0 0.0
        %398 = vmatprep.subr.mxu0 0.0
        %399 = vmatpush2.msra.mxu0 0.0
        %400 = vmatprep.subr.mxu0 0.0
        %401 = vmatpush2.msra.mxu0 0.0
        %402 = vmatprep.subr.mxu0 0.0
        %403 = vmatpush2.msra.mxu0 0.0
        %404 = vmatprep.subr.mxu0 0.0
        %405 = vmatpush2.msra.mxu0 0.0
        %406 = vmatprep.subr.mxu0 0.0
        %407 = vmatpush2.msra.mxu0 0.0
        %408 = vmatprep.subr.mxu0 0.0
        %409 = vmatpush2.msra.mxu0 0.0
        %410 = vmatprep.subr.mxu0 0.0
        %411 = vmatpush2.msra.mxu0 0.0
        %412 = vmatprep.subr.mxu0 0.0
        %413 = vmatpush2.msra.mxu0 0.0
        %414 = vmatprep.subr.mxu0 0.0
        %415 = vmatpush2.msra.mxu0 0.0
        %416 = vmatprep.subr.mxu0 0.0
        %417 = vmatpush2.msra.mxu0 0.0
        %418 = vmatprep.subr.mxu0 0.0
        %419 = vmatpush2.msra.mxu0 0.0
        %420 = vmatprep.subr.mxu0 0.0
        %421 = vmatpush2.msra.mxu0 0.0
        %422 = vmatprep.subr.mxu0 0.0
        %423 = vmatpush2.msra.mxu0 0.0
        %424 = vmatprep.mubr.f32.mxu0 0.0
        %425 = vmatmul.mubr.f32.gmra.mxu0 %v358
        %v426 = vpop.f32.mrf.mxu0
        %v427 = vadd.f32 0.0, %v426
        %v428 = vpop.f32.mrf.mxu0
        %429 = vdwg.mxu0
        %vm430 = vcmask 64512
        %431 = vst.msk [vmem:[%s300] sm:$0xff] %vm430, %v427
        %433 = vrot.lane.b32.xlu0 %v427, 96
        %v434 = vpop.permute.xlu0 %433
        %436 = vst.msk [vmem:[%s306] sm:$0xff] %vm430, %v434
        %437 = vrot.lane.b32.xlu0 %v427, 64
        %v438 = vpop.permute.xlu0 %437
        %440 = vst.msk [vmem:[%s312] sm:$0xff] %vm430, %v438
        %441 = vrot.lane.b32.xlu0 %v427, 120
        %v442 = vpop.permute.xlu0 %441
        %s444 = scalar_lea.vmem %s300, 8 [#allocation6]
        %445 = vst.msk [vmem:[%s444] sm:$0xff] %vm430, %v442
        %446 = vrot.lane.b32.xlu0 %v427, 88
        %v447 = vpop.permute.xlu0 %446
        %s449 = scalar_lea.vmem %s306, 8 [#allocation7]
        %450 = vst.msk [vmem:[%s449] sm:$0xff] %vm430, %v447
        %451 = vrot.lane.b32.xlu0 %v427, 56
        %v452 = vpop.permute.xlu0 %451
        %s454 = scalar_lea.vmem %s312, 8 [#allocation8]
        %455 = vst.msk [vmem:[%s454] sm:$0xff] %vm430, %v452
        %456 = vrot.lane.b32.xlu0 %v427, 112
        %v457 = vpop.permute.xlu0 %456
        %s459 = scalar_lea.vmem %s300, 16 [#allocation6]
        %460 = vst.msk [vmem:[%s459] sm:$0xff] %vm430, %v457
        %461 = vrot.lane.b32.xlu0 %v427, 80
        %v462 = vpop.permute.xlu0 %461
        %s464 = scalar_lea.vmem %s306, 16 [#allocation7]
        %465 = vst.msk [vmem:[%s464] sm:$0xff] %vm430, %v462
        %466 = vrot.lane.b32.xlu0 %v427, 48
        %v467 = vpop.permute.xlu0 %466
        %s469 = scalar_lea.vmem %s312, 16 [#allocation8]
        %470 = vst.msk [vmem:[%s469] sm:$0xff] %vm430, %v467
        %471 = vrot.lane.b32.xlu0 %v427, 104
        %v472 = vpop.permute.xlu0 %471
        %s474 = scalar_lea.vmem %s300, 24 [#allocation6]
        %475 = vst.msk [vmem:[%s474] sm:$0xff] %vm430, %v472
        %476 = vrot.lane.b32.xlu0 %v427, 72
        %v477 = vpop.permute.xlu0 %476
        %s479 = scalar_lea.vmem %s306, 24 [#allocation7]
        %480 = vst.msk [vmem:[%s479] sm:$0xff] %vm430, %v477
        %481 = vrot.lane.b32.xlu0 %v427, 40
        %v482 = vpop.permute.xlu0 %481
        %s484 = scalar_lea.vmem %s312, 24 [#allocation8]
        %485 = vst.msk [vmem:[%s484] sm:$0xff] %vm430, %v482
        %s486 = sand.u32 %s135, 1
        %s487 = sand.u32 %s135, 1
        %s488 = smul.addr %s487, 32
        %s489 = scalar_lea.vmem [#allocation6], %s488
        %s490 = sand.u32 %s163, 1
        %s491 = sand.u32 %s163, 1
        %s492 = smul.addr %s491, 32
        %s493 = scalar_lea.vmem [#allocation7], %s492
        %s494 = sand.u32 %s191, 1
        %s495 = sand.u32 %s191, 1
        %s496 = smul.addr %s495, 32
        %s497 = scalar_lea.vmem [#allocation8], %s496
        // Predicated region
        $region45: #{tpu_custom_call.1} parent=35 // pred_check
          %p498 = pneg %p145
        $region46: #{tpu_custom_call.1} parent=35 // pred_check_branch
          %500 = sbr.rel (%p498) target = $region48
        $region47: #{tpu_custom_call.1} parent=35 // pred_region
          %s501 = smul.addr %s26, 8
          %s502 = sadd.s32 %s27, %s501
          %s503 = smul.addr %s502, 8
          %s504 = scalar_lea.vmem %s4, %s503
          // Predicated region
          $region49: #{tpu_custom_call.1} parent=47 // pred_check
            _
          $region50: #{tpu_custom_call.1} parent=47 // pred_check_branch
            %506 = sbr.rel (0) target = $region52
          $region51: #{tpu_custom_call.1} parent=47 // pred_region
            // Predicated region
            $region53: #{tpu_custom_call.1} parent=51 // pred_check
              _
            $region54: #{tpu_custom_call.1} parent=51 // pred_check_branch
              %508 = sbr.rel (0) target = $region56
            $region55: #{tpu_custom_call.1} parent=51 // pred_region
              // Predicated region
              $region68: #{tpu_custom_call.1} parent=55 // pred_check
                _
              $region69: #{tpu_custom_call.1} parent=55 // pred_check_branch
                %530 = sbr.rel (0) target = $region71
              $region70: #{tpu_custom_call.1} parent=55 // pred_region
                loop: start=0, step=1, limit=1
                $region72: #{tpu_custom_call.1} parent=70 // loop_pre_header
                  _
                $region73: #{tpu_custom_call.1} parent=70 // loop_header
                  %s532 = sphi 0, %s536
                  %p533 = scmp.ge.s32.totalorder %s532, 1
                  %s537 = sphi %s489, %s489
                  %s538 = sphi %s504, %s504
                $region74: #{tpu_custom_call.1} parent=70 // loop_header_branch
                  %535 = sbr.rel (%p533) target = $region78
                $region75: #{tpu_custom_call.1} parent=70 // loop_body
                  %v539 = vld [vmem:[%s537] sm:$0xff]
                  %540 = vst [vmem:[%s538] sm:$0xff] %v539
                  %v541 = vld [vmem:[%s537 + $0x8] sm:$0xff]
                  %542 = vst [vmem:[%s538 + $0x10] sm:$0xff] %v541
                  %v543 = vld [vmem:[%s537 + $0x10] sm:$0xff]
                  %544 = vst [vmem:[%s538 + $0x20] sm:$0xff] %v543
                  %v545 = vld [vmem:[%s537 + $0x18] sm:$0xff]
                  %546 = vst [vmem:[%s538 + $0x30] sm:$0xff] %v545
                $region76: #{tpu_custom_call.1} parent=70 // loop_footer
                  %s536 = sadd.s32 1, %s532
                $region77: #{tpu_custom_call.1} parent=70 // loop_footer_branch
                  %531 = sbr.rel target = $region73
                $region78: #{tpu_custom_call.1} parent=70 // loop_exit
                  _
              $region71: #{tpu_custom_call.1} parent=55 // pred_fallthru
                _
              // Predicated region
              $region79: #{tpu_custom_call.1} parent=55 // pred_check
                _
              $region80: #{tpu_custom_call.1} parent=55 // pred_check_branch
                %548 = sbr.rel target = $region82
              $region81: #{tpu_custom_call.1} parent=55 // pred_region
                _
              $region82: #{tpu_custom_call.1} parent=55 // pred_fallthru
                _
            $region56: #{tpu_custom_call.1} parent=51 // pred_fallthru
              _
            // Predicated region
            $region57: #{tpu_custom_call.1} parent=51 // pred_check
              _
            $region58: #{tpu_custom_call.1} parent=51 // pred_check_branch
              %510 = sbr.rel target = $region60
            $region59: #{tpu_custom_call.1} parent=51 // pred_region
              %s512 = ssub.s32 256, 1
              loop: start=0, step=1, limit=1
              $region61: #{tpu_custom_call.1} parent=59 // loop_pre_header
                _
              $region62: #{tpu_custom_call.1} parent=59 // loop_header
                %s514 = sphi 0, %s518
                %p515 = scmp.ge.s32.totalorder %s514, 1
                %s519 = sphi %s489, %s489
                %s520 = sphi %s504, %s504
              $region63: #{tpu_custom_call.1} parent=59 // loop_header_branch
                %517 = sbr.rel (%p515) target = $region67
              $region64: #{tpu_custom_call.1} parent=59 // loop_body
                %v521 = vld [vmem:[%s519] sm:%s512]
                %522 = vst [vmem:[%s520] sm:%s512] %v521
                %v523 = vld [vmem:[%s519 + $0x8] sm:%s512]
                %524 = vst [vmem:[%s520 + $0x10] sm:%s512] %v523
                %v525 = vld [vmem:[%s519 + $0x10] sm:%s512]
                %526 = vst [vmem:[%s520 + $0x20] sm:%s512] %v525
                %v527 = vld [vmem:[%s519 + $0x18] sm:%s512]
                %528 = vst [vmem:[%s520 + $0x30] sm:%s512] %v527
              $region65: #{tpu_custom_call.1} parent=59 // loop_footer
                %s518 = sadd.s32 1, %s514
              $region66: #{tpu_custom_call.1} parent=59 // loop_footer_branch
                %513 = sbr.rel target = $region62
              $region67: #{tpu_custom_call.1} parent=59 // loop_exit
                _
            $region60: #{tpu_custom_call.1} parent=51 // pred_fallthru
              _
          $region52: #{tpu_custom_call.1} parent=47 // pred_fallthru
            _
          %549 = vnop
        $region48: #{tpu_custom_call.1} parent=35 // pred_fallthru
          _
        // Predicated region
        $region83: #{tpu_custom_call.1} parent=35 // pred_check
          %p550 = pneg %p173
        $region84: #{tpu_custom_call.1} parent=35 // pred_check_branch
          %552 = sbr.rel (%p550) target = $region86
        $region85: #{tpu_custom_call.1} parent=35 // pred_region
          %s553 = smul.addr %s26, 8
          %s554 = sadd.s32 %s27, %s553
          %s555 = smul.addr %s554, 8
          %s556 = scalar_lea.vmem %s5, %s555
          // Predicated region
          $region87: #{tpu_custom_call.1} parent=85 // pred_check
            _
          $region88: #{tpu_custom_call.1} parent=85 // pred_check_branch
            %558 = sbr.rel (0) target = $region90
          $region89: #{tpu_custom_call.1} parent=85 // pred_region
            // Predicated region
            $region91: #{tpu_custom_call.1} parent=89 // pred_check
              _
            $region92: #{tpu_custom_call.1} parent=89 // pred_check_branch
              %560 = sbr.rel (0) target = $region94
            $region93: #{tpu_custom_call.1} parent=89 // pred_region
              // Predicated region
              $region106: #{tpu_custom_call.1} parent=93 // pred_check
                _
              $region107: #{tpu_custom_call.1} parent=93 // pred_check_branch
                %582 = sbr.rel (0) target = $region109
              $region108: #{tpu_custom_call.1} parent=93 // pred_region
                loop: start=0, step=1, limit=1
                $region110: #{tpu_custom_call.1} parent=108 // loop_pre_header
                  _
                $region111: #{tpu_custom_call.1} parent=108 // loop_header
                  %s584 = sphi 0, %s588
                  %p585 = scmp.ge.s32.totalorder %s584, 1
                  %s589 = sphi %s493, %s493
                  %s590 = sphi %s556, %s556
                $region112: #{tpu_custom_call.1} parent=108 // loop_header_branch
                  %587 = sbr.rel (%p585) target = $region116
                $region113: #{tpu_custom_call.1} parent=108 // loop_body
                  %v591 = vld [vmem:[%s589] sm:$0xff]
                  %592 = vst [vmem:[%s590] sm:$0xff] %v591
                  %v593 = vld [vmem:[%s589 + $0x8] sm:$0xff]
                  %594 = vst [vmem:[%s590 + $0x10] sm:$0xff] %v593
                  %v595 = vld [vmem:[%s589 + $0x10] sm:$0xff]
                  %596 = vst [vmem:[%s590 + $0x20] sm:$0xff] %v595
                  %v597 = vld [vmem:[%s589 + $0x18] sm:$0xff]
                  %598 = vst [vmem:[%s590 + $0x30] sm:$0xff] %v597
                $region114: #{tpu_custom_call.1} parent=108 // loop_footer
                  %s588 = sadd.s32 1, %s584
                $region115: #{tpu_custom_call.1} parent=108 // loop_footer_branch
                  %583 = sbr.rel target = $region111
                $region116: #{tpu_custom_call.1} parent=108 // loop_exit
                  _
              $region109: #{tpu_custom_call.1} parent=93 // pred_fallthru
                _
              // Predicated region
              $region117: #{tpu_custom_call.1} parent=93 // pred_check
                _
              $region118: #{tpu_custom_call.1} parent=93 // pred_check_branch
                %600 = sbr.rel target = $region120
              $region119: #{tpu_custom_call.1} parent=93 // pred_region
                _
              $region120: #{tpu_custom_call.1} parent=93 // pred_fallthru
                _
            $region94: #{tpu_custom_call.1} parent=89 // pred_fallthru
              _
            // Predicated region
            $region95: #{tpu_custom_call.1} parent=89 // pred_check
              _
            $region96: #{tpu_custom_call.1} parent=89 // pred_check_branch
              %562 = sbr.rel target = $region98
            $region97: #{tpu_custom_call.1} parent=89 // pred_region
              %s564 = ssub.s32 256, 1
              loop: start=0, step=1, limit=1
              $region99: #{tpu_custom_call.1} parent=97 // loop_pre_header
                _
              $region100: #{tpu_custom_call.1} parent=97 // loop_header
                %s566 = sphi 0, %s570
                %p567 = scmp.ge.s32.totalorder %s566, 1
                %s571 = sphi %s493, %s493
                %s572 = sphi %s556, %s556
              $region101: #{tpu_custom_call.1} parent=97 // loop_header_branch
                %569 = sbr.rel (%p567) target = $region105
              $region102: #{tpu_custom_call.1} parent=97 // loop_body
                %v573 = vld [vmem:[%s571] sm:%s564]
                %574 = vst [vmem:[%s572] sm:%s564] %v573
                %v575 = vld [vmem:[%s571 + $0x8] sm:%s564]
                %576 = vst [vmem:[%s572 + $0x10] sm:%s564] %v575
                %v577 = vld [vmem:[%s571 + $0x10] sm:%s564]
                %578 = vst [vmem:[%s572 + $0x20] sm:%s564] %v577
                %v579 = vld [vmem:[%s571 + $0x18] sm:%s564]
                %580 = vst [vmem:[%s572 + $0x30] sm:%s564] %v579
              $region103: #{tpu_custom_call.1} parent=97 // loop_footer
                %s570 = sadd.s32 1, %s566
              $region104: #{tpu_custom_call.1} parent=97 // loop_footer_branch
                %565 = sbr.rel target = $region100
              $region105: #{tpu_custom_call.1} parent=97 // loop_exit
                _
            $region98: #{tpu_custom_call.1} parent=89 // pred_fallthru
              _
          $region90: #{tpu_custom_call.1} parent=85 // pred_fallthru
            _
          %601 = vnop
        $region86: #{tpu_custom_call.1} parent=35 // pred_fallthru
          _
        // Predicated region
        $region121: #{tpu_custom_call.1} parent=35 // pred_check
          %p602 = pneg %p201
        $region122: #{tpu_custom_call.1} parent=35 // pred_check_branch
          %604 = sbr.rel (%p602) target = $region124
        $region123: #{tpu_custom_call.1} parent=35 // pred_region
          %s605 = smul.addr %s26, 8
          %s606 = sadd.s32 %s27, %s605
          %s607 = smul.addr %s606, 8
          %s608 = scalar_lea.vmem %s6, %s607
          // Predicated region
          $region125: #{tpu_custom_call.1} parent=123 // pred_check
            _
          $region126: #{tpu_custom_call.1} parent=123 // pred_check_branch
            %610 = sbr.rel (0) target = $region128
          $region127: #{tpu_custom_call.1} parent=123 // pred_region
            // Predicated region
            $region129: #{tpu_custom_call.1} parent=127 // pred_check
              _
            $region130: #{tpu_custom_call.1} parent=127 // pred_check_branch
              %612 = sbr.rel (0) target = $region132
            $region131: #{tpu_custom_call.1} parent=127 // pred_region
              // Predicated region
              $region144: #{tpu_custom_call.1} parent=131 // pred_check
                _
              $region145: #{tpu_custom_call.1} parent=131 // pred_check_branch
                %634 = sbr.rel (0) target = $region147
              $region146: #{tpu_custom_call.1} parent=131 // pred_region
                loop: start=0, step=1, limit=1
                $region148: #{tpu_custom_call.1} parent=146 // loop_pre_header
                  _
                $region149: #{tpu_custom_call.1} parent=146 // loop_header
                  %s636 = sphi 0, %s640
                  %p637 = scmp.ge.s32.totalorder %s636, 1
                  %s641 = sphi %s497, %s497
                  %s642 = sphi %s608, %s608
                $region150: #{tpu_custom_call.1} parent=146 // loop_header_branch
                  %639 = sbr.rel (%p637) target = $region154
                $region151: #{tpu_custom_call.1} parent=146 // loop_body
                  %v643 = vld [vmem:[%s641] sm:$0xff]
                  %644 = vst [vmem:[%s642] sm:$0xff] %v643
                  %v645 = vld [vmem:[%s641 + $0x8] sm:$0xff]
                  %646 = vst [vmem:[%s642 + $0x10] sm:$0xff] %v645
                  %v647 = vld [vmem:[%s641 + $0x10] sm:$0xff]
                  %648 = vst [vmem:[%s642 + $0x20] sm:$0xff] %v647
                  %v649 = vld [vmem:[%s641 + $0x18] sm:$0xff]
                  %650 = vst [vmem:[%s642 + $0x30] sm:$0xff] %v649
                $region152: #{tpu_custom_call.1} parent=146 // loop_footer
                  %s640 = sadd.s32 1, %s636
                $region153: #{tpu_custom_call.1} parent=146 // loop_footer_branch
                  %635 = sbr.rel target = $region149
                $region154: #{tpu_custom_call.1} parent=146 // loop_exit
                  _
              $region147: #{tpu_custom_call.1} parent=131 // pred_fallthru
                _
              // Predicated region
              $region155: #{tpu_custom_call.1} parent=131 // pred_check
                _
              $region156: #{tpu_custom_call.1} parent=131 // pred_check_branch
                %652 = sbr.rel target = $region158
              $region157: #{tpu_custom_call.1} parent=131 // pred_region
                _
              $region158: #{tpu_custom_call.1} parent=131 // pred_fallthru
                _
            $region132: #{tpu_custom_call.1} parent=127 // pred_fallthru
              _
            // Predicated region
            $region133: #{tpu_custom_call.1} parent=127 // pred_check
              _
            $region134: #{tpu_custom_call.1} parent=127 // pred_check_branch
              %614 = sbr.rel target = $region136
            $region135: #{tpu_custom_call.1} parent=127 // pred_region
              %s616 = ssub.s32 256, 1
              loop: start=0, step=1, limit=1
              $region137: #{tpu_custom_call.1} parent=135 // loop_pre_header
                _
              $region138: #{tpu_custom_call.1} parent=135 // loop_header
                %s618 = sphi 0, %s622
                %p619 = scmp.ge.s32.totalorder %s618, 1
                %s623 = sphi %s497, %s497
                %s624 = sphi %s608, %s608
              $region139: #{tpu_custom_call.1} parent=135 // loop_header_branch
                %621 = sbr.rel (%p619) target = $region143
              $region140: #{tpu_custom_call.1} parent=135 // loop_body
                %v625 = vld [vmem:[%s623] sm:%s616]
                %626 = vst [vmem:[%s624] sm:%s616] %v625
                %v627 = vld [vmem:[%s623 + $0x8] sm:%s616]
                %628 = vst [vmem:[%s624 + $0x10] sm:%s616] %v627
                %v629 = vld [vmem:[%s623 + $0x10] sm:%s616]
                %630 = vst [vmem:[%s624 + $0x20] sm:%s616] %v629
                %v631 = vld [vmem:[%s623 + $0x18] sm:%s616]
                %632 = vst [vmem:[%s624 + $0x30] sm:%s616] %v631
              $region141: #{tpu_custom_call.1} parent=135 // loop_footer
                %s622 = sadd.s32 1, %s618
              $region142: #{tpu_custom_call.1} parent=135 // loop_footer_branch
                %617 = sbr.rel target = $region138
              $region143: #{tpu_custom_call.1} parent=135 // loop_exit
                _
            $region136: #{tpu_custom_call.1} parent=127 // pred_fallthru
              _
          $region128: #{tpu_custom_call.1} parent=123 // pred_fallthru
            _
          %653 = vnop
        $region124: #{tpu_custom_call.1} parent=35 // pred_fallthru
          _
      $region36: #{tpu_custom_call.1} parent=5 // pred_fallthru
        _
      %p654 = scmp.le.s32.totalorder 2, %s17
      // Predicated region
      $region159: #{tpu_custom_call.1} parent=5 // pred_check
        %p655 = pneg %p654
      $region160: #{tpu_custom_call.1} parent=5 // pred_check_branch
        %657 = sbr.rel (%p655) target = $region162
      $region161: #{tpu_custom_call.1} parent=5 // pred_region
        %s658 = ssub.s32 %s17, 2
        // Predicated region
        $region163: #{tpu_custom_call.1} parent=161 // pred_check
          %p659 = pneg %p151
        $region164: #{tpu_custom_call.1} parent=161 // pred_check_branch
          %661 = sbr.rel (%p659) target = $region166
        $region165: #{tpu_custom_call.1} parent=161 // pred_region
          %s662 = sand.u32 %s136, 1
          %s663 = sand.u32 %s136, 1
          %s664 = smul.addr %s663, 32
          %s665 = scalar_lea.vmem [#allocation6], %s664
        $region166: #{tpu_custom_call.1} parent=161 // pred_fallthru
          _
        // Predicated region
        $region167: #{tpu_custom_call.1} parent=161 // pred_check
          %p666 = pneg %p179
        $region168: #{tpu_custom_call.1} parent=161 // pred_check_branch
          %668 = sbr.rel (%p666) target = $region170
        $region169: #{tpu_custom_call.1} parent=161 // pred_region
          %s669 = sand.u32 %s164, 1
          %s670 = sand.u32 %s164, 1
          %s671 = smul.addr %s670, 32
          %s672 = scalar_lea.vmem [#allocation7], %s671
        $region170: #{tpu_custom_call.1} parent=161 // pred_fallthru
          _
        // Predicated region
        $region171: #{tpu_custom_call.1} parent=161 // pred_check
          %p673 = pneg %p207
        $region172: #{tpu_custom_call.1} parent=161 // pred_check_branch
          %675 = sbr.rel (%p673) target = $region174
        $region173: #{tpu_custom_call.1} parent=161 // pred_region
          %s676 = sand.u32 %s192, 1
          %s677 = sand.u32 %s192, 1
          %s678 = smul.addr %s677, 32
          %s679 = scalar_lea.vmem [#allocation8], %s678
        $region174: #{tpu_custom_call.1} parent=161 // pred_fallthru
          _
      $region162: #{tpu_custom_call.1} parent=5 // pred_fallthru
        _
    $region6: #{tpu_custom_call.1} parent=1 // loop_footer
      %s21 = sadd.s32 1, %s17
    $region7: #{tpu_custom_call.1} parent=1 // loop_footer_branch
      %16 = sbr.rel target = $region3
    $region8: #{tpu_custom_call.1} parent=1 // loop_exit
      _
    %680 = vsyncpa [#allocation3], 1
    %s681 = scalar_lea.sflag [#allocation3], 1
    %682 = vsyncpa %s681, 1
    %683 = vsyncpa [#allocation5], 1

</llo_original>
